<compile_context>
chip_gen: v7x
topology: tpu7x:2x2x1
jax: 0.10.0
libtpu: 0.0.40
codegen_flags: <defaults>
</compile_context>

<pallas_src>
import functools
import math

import jax
import jax.numpy as jnp
from jax.experimental import pallas as pl
from jax.experimental.pallas import tpu as pltpu


# Layers followed by Tanh (latent layer 3 and final layer 7 are purely linear).
_TANH_LAYERS = (0, 1, 2, 4, 5, 6)
_NUM_LAYERS = 8


def _round_up(n, m):
    return ((n + m - 1) // m) * m


def _autoencoder_kernel(x_ref, w_ref, b_ref, o_ref):
    """Full 8-layer forward pass for one (batch_tile, C) tile, all in VMEM.

    x_ref : (tile, C)      bf16   zero-padded activations
    w_ref : (8, C, C)      bf16   zero-padded, pre-transposed weights (in, out)
    b_ref : (8, C)         f32    zero-padded biases
    o_ref : (tile, C)      f32    zero-padded output
    """
    h = x_ref[...]                                     # bf16 MXU operand
    for layer in range(_NUM_LAYERS):                   # statically unrolled
        acc = jnp.dot(h, w_ref[layer],
                      preferred_element_type=jnp.float32)
        acc = acc + b_ref[layer].reshape(1, -1)        # f32 bias add
        if layer in _TANH_LAYERS:
            acc = jnp.tanh(acc)                        # f32 tanh (v5e-safe)
        if layer < _NUM_LAYERS - 1:
            h = acc.astype(jnp.bfloat16)               # bf16 for next MXU pass
        else:
            o_ref[...] = acc.astype(o_ref.dtype)


def init_autoencoder_params(key, input_dim, hidden_dim, dtype=jnp.float32):
    """PyTorch-style nn.Linear init: W,(b) ~ U(-1/sqrt(fan_in), 1/sqrt(fan_in)).

    Returns a list of 8 (weight, bias) pairs with PyTorch layout:
    weight (out_features, in_features), bias (out_features,).
    """
    dims = [
        (input_dim, 100), (100, 50), (50, 25), (25, hidden_dim),   # encoder
        (hidden_dim, 25), (25, 50), (50, 100), (100, input_dim),   # decoder
    ]
    params = []
    for (fan_in, fan_out) in dims:
        key, kw, kb = jax.random.split(key, 3)
        bound = 1.0 / math.sqrt(fan_in)
        w = jax.random.uniform(kw, (fan_out, fan_in), dtype, -bound, bound)
        b = jax.random.uniform(kb, (fan_out,), dtype, -bound, bound)
        params.append((w, b))
    return params


def pack_params(params, input_dim, hidden_dim):
    """Pack the 8 (W, b) pairs into one bf16 weight slab + one f32 bias slab.

    Weights are stored transposed to (in_features, out_features) and
    zero-padded to (C, C) with C = 128-multiple >= input_dim, so every layer
    is a lane-aligned  y = h @ W + b.
    """
    dims = [
        (input_dim, 100), (100, 50), (50, 25), (25, hidden_dim),
        (hidden_dim, 25), (25, 50), (50, 100), (100, input_dim),
    ]
    C = max(128, _round_up(input_dim, 128))
    assert hidden_dim <= C and 100 <= C
    w_slab = jnp.zeros((_NUM_LAYERS, C, C), jnp.bfloat16)
    b_slab = jnp.zeros((_NUM_LAYERS, C), jnp.float32)
    for layer, ((fan_in, fan_out), (w, b)) in enumerate(zip(dims, params)):
        w_slab = w_slab.at[layer, :fan_in, :fan_out].set(
            w.T.astype(jnp.bfloat16))
        b_slab = b_slab.at[layer, :fan_out].set(b.astype(jnp.float32))
    return w_slab, b_slab


@functools.partial(jax.jit, static_argnames=("batch_tile",))
def autoencoder_forward(x, w_slab, b_slab, *, batch_tile=256):
    B, input_dim = x.shape
    C = w_slab.shape[-1]
    assert C % 128 == 0 and input_dim <= C

    # Pad batch to a tile multiple and features to the lane-dense width C.
    B_pad = _round_up(B, batch_tile)
    x_p = jnp.zeros((B_pad, C), jnp.bfloat16)
    x_p = x_p.at[:B, :input_dim].set(x.astype(jnp.bfloat16))

    grid = (B_pad // batch_tile,)

    cost = pl.CostEstimate(
        flops=int(2 * B_pad * _NUM_LAYERS * C * C),
        transcendentals=int(len(_TANH_LAYERS) * B_pad * C),
        bytes_accessed=int(B_pad * C * 2 + B_pad * C * 4
                           + w_slab.size * 2 + b_slab.size * 4),
    )

    out = pl.pallas_call(
        _autoencoder_kernel,
        out_shape=jax.ShapeDtypeStruct((B_pad, C), jnp.float32),
        grid_spec=pltpu.PrefetchScalarGridSpec(
            num_scalar_prefetch=0,
            grid=grid,
            in_specs=[
                pl.BlockSpec((batch_tile, C), lambda i: (i, 0)),      # x
                pl.BlockSpec((_NUM_LAYERS, C, C), lambda i: (0, 0, 0)),  # W slab
                pl.BlockSpec((_NUM_LAYERS, C), lambda i: (0, 0)),        # b slab
            ],
            out_specs=pl.BlockSpec((batch_tile, C), lambda i: (i, 0)),
        ),
        compiler_params=pltpu.CompilerParams(
            dimension_semantics=("parallel",)),
        cost_estimate=cost,
    )(x_p, w_slab, b_slab)

    return out[:B, :input_dim]


def _reference_forward(x, params, emulate_bf16=True):
    """Pure-JAX reference. emulate_bf16=True mirrors the kernel's bf16 MXU
    operands with f32 accumulation; False is the exact f32 PyTorch math."""
    h = x
    for layer, (w, b) in enumerate(params):
        if emulate_bf16:
            y = jnp.dot(h.astype(jnp.bfloat16), w.T.astype(jnp.bfloat16),
                        preferred_element_type=jnp.float32) + b
        else:
            y = h @ w.T + b
        h = y if layer in (3, 7) else jnp.tanh(y)
    return h


if __name__ == "__main__":
    key = jax.random.PRNGKey(0)
    input_dim, hidden_dim = 128, 16
    batch = 512          # grid = 2 tiles of 256 -> both cores get work
    batch_tile = 256

    kx, kp = jax.random.split(key)
    x = jax.random.normal(kx, (batch, input_dim), jnp.float32)
    params = init_autoencoder_params(kp, input_dim, hidden_dim)
    w_slab, b_slab = pack_params(params, input_dim, hidden_dim)

    out = autoencoder_forward(x, w_slab, b_slab, batch_tile=batch_tile)
    out = jax.block_until_ready(out)

    ref_bf16 = _reference_forward(x, params, emulate_bf16=True)
    ref_f32 = _reference_forward(x, params, emulate_bf16=False)

    assert out.shape == (batch, input_dim)
    assert jnp.allclose(out, ref_bf16, atol=5e-3, rtol=5e-3), \
        "mismatch vs bf16-operand reference"
    assert jnp.allclose(out, ref_f32, atol=1e-1, rtol=1e-1), \
        "mismatch vs f32 reference (bf16 quantization drift too large)"

    print("KERNEL_OK")
</pallas_src>

<mosaic_0001>
module attributes {stable_mosaic.version = 11 : i64} {
  func.func @_autoencoder_kernel(%arg0: i32, %arg1: memref<256x128xbf16, #tpu.memory_space<vmem>>, %arg2: memref<8x128x128xbf16, #tpu.memory_space<vmem>>, %arg3: memref<8x128xf32, #tpu.memory_space<vmem>>, %arg4: memref<256x128xf32, #tpu.memory_space<vmem>>) attributes {dimension_semantics = [#tpu.dimension_semantics<parallel>], iteration_bounds = array<i64: 2>, scalar_prefetch = 0 : i64, scratch_operands = 0 : i64, tpu.core_type = #tpu.core_type<tc>, window_params = [{transform_indices = @transform_0, window_bounds = array<i64: 256, 128>}, {pipeline_mode = #tpu.pipeline_mode<synchronous>, transform_indices = @transform_1, window_bounds = array<i64: 8, 128, 128>}, {pipeline_mode = #tpu.pipeline_mode<synchronous>, transform_indices = @transform_2, window_bounds = array<i64: 8, 128>}, {transform_indices = @transform_3, window_bounds = array<i64: 256, 128>}]} {
    %c0 = arith.constant 0 : index
    %c0_0 = arith.constant 0 : index
    %0 = vector.load %arg1[%c0, %c0_0] : memref<256x128xbf16, #tpu.memory_space<vmem>>, vector<256x128xbf16>
    %c0_1 = arith.constant 0 : index
    %c0_2 = arith.constant 0 : index
    %c0_3 = arith.constant 0 : index
    %1 = vector.load %arg2[%c0_1, %c0_2, %c0_3] : memref<8x128x128xbf16, #tpu.memory_space<vmem>>, vector<1x128x128xbf16>
    %2 = vector.shape_cast %1 : vector<1x128x128xbf16> to vector<128x128xbf16>
    %cst = arith.constant dense<0.000000e+00> : vector<256x128xf32>
    %3 = tpu.matmul %0, %2, %cst {dimension_numbers = #tpu.dot_dimension_numbers<[1], [0], [0], [1], [0, 0, 1, 1], [], []>} : vector<256x128xbf16>, vector<128x128xbf16>, vector<256x128xf32> -> vector<256x128xf32>
    %c0_4 = arith.constant 0 : index
    %c0_5 = arith.constant 0 : index
    %4 = vector.load %arg3[%c0_4, %c0_5] : memref<8x128xf32, #tpu.memory_space<vmem>>, vector<1x128xf32>
    %5 = vector.shape_cast %4 : vector<1x128xf32> to vector<128xf32>
    %6 = vector.shape_cast %5 : vector<128xf32> to vector<1x128xf32>
    %7 = vector.broadcast %6 : vector<1x128xf32> to vector<256x128xf32>
    %8 = arith.addf %3, %7 : vector<256x128xf32>
    %9 = math.tanh %8 : vector<256x128xf32>
    %10 = arith.truncf %9 : vector<256x128xf32> to vector<256x128xbf16>
    %c1 = arith.constant 1 : index
    %c0_6 = arith.constant 0 : index
    %c0_7 = arith.constant 0 : index
    %11 = vector.load %arg2[%c1, %c0_6, %c0_7] : memref<8x128x128xbf16, #tpu.memory_space<vmem>>, vector<1x128x128xbf16>
    %12 = vector.shape_cast %11 : vector<1x128x128xbf16> to vector<128x128xbf16>
    %cst_8 = arith.constant dense<0.000000e+00> : vector<256x128xf32>
    %13 = tpu.matmul %10, %12, %cst_8 {dimension_numbers = #tpu.dot_dimension_numbers<[1], [0], [0], [1], [0, 0, 1, 1], [], []>} : vector<256x128xbf16>, vector<128x128xbf16>, vector<256x128xf32> -> vector<256x128xf32>
    %c1_9 = arith.constant 1 : index
    %c0_10 = arith.constant 0 : index
    %14 = vector.load %arg3[%c1_9, %c0_10] : memref<8x128xf32, #tpu.memory_space<vmem>>, vector<1x128xf32>
    %15 = vector.shape_cast %14 : vector<1x128xf32> to vector<128xf32>
    %16 = vector.shape_cast %15 : vector<128xf32> to vector<1x128xf32>
    %17 = vector.broadcast %16 : vector<1x128xf32> to vector<256x128xf32>
    %18 = arith.addf %13, %17 : vector<256x128xf32>
    %19 = math.tanh %18 : vector<256x128xf32>
    %20 = arith.truncf %19 : vector<256x128xf32> to vector<256x128xbf16>
    %c2 = arith.constant 2 : index
    %c0_11 = arith.constant 0 : index
    %c0_12 = arith.constant 0 : index
    %21 = vector.load %arg2[%c2, %c0_11, %c0_12] : memref<8x128x128xbf16, #tpu.memory_space<vmem>>, vector<1x128x128xbf16>
    %22 = vector.shape_cast %21 : vector<1x128x128xbf16> to vector<128x128xbf16>
    %cst_13 = arith.constant dense<0.000000e+00> : vector<256x128xf32>
    %23 = tpu.matmul %20, %22, %cst_13 {dimension_numbers = #tpu.dot_dimension_numbers<[1], [0], [0], [1], [0, 0, 1, 1], [], []>} : vector<256x128xbf16>, vector<128x128xbf16>, vector<256x128xf32> -> vector<256x128xf32>
    %c2_14 = arith.constant 2 : index
    %c0_15 = arith.constant 0 : index
    %24 = vector.load %arg3[%c2_14, %c0_15] : memref<8x128xf32, #tpu.memory_space<vmem>>, vector<1x128xf32>
    %25 = vector.shape_cast %24 : vector<1x128xf32> to vector<128xf32>
    %26 = vector.shape_cast %25 : vector<128xf32> to vector<1x128xf32>
    %27 = vector.broadcast %26 : vector<1x128xf32> to vector<256x128xf32>
    %28 = arith.addf %23, %27 : vector<256x128xf32>
    %29 = math.tanh %28 : vector<256x128xf32>
    %30 = arith.truncf %29 : vector<256x128xf32> to vector<256x128xbf16>
    %c3 = arith.constant 3 : index
    %c0_16 = arith.constant 0 : index
    %c0_17 = arith.constant 0 : index
    %31 = vector.load %arg2[%c3, %c0_16, %c0_17] : memref<8x128x128xbf16, #tpu.memory_space<vmem>>, vector<1x128x128xbf16>
    %32 = vector.shape_cast %31 : vector<1x128x128xbf16> to vector<128x128xbf16>
    %cst_18 = arith.constant dense<0.000000e+00> : vector<256x128xf32>
    %33 = tpu.matmul %30, %32, %cst_18 {dimension_numbers = #tpu.dot_dimension_numbers<[1], [0], [0], [1], [0, 0, 1, 1], [], []>} : vector<256x128xbf16>, vector<128x128xbf16>, vector<256x128xf32> -> vector<256x128xf32>
    %c3_19 = arith.constant 3 : index
    %c0_20 = arith.constant 0 : index
    %34 = vector.load %arg3[%c3_19, %c0_20] : memref<8x128xf32, #tpu.memory_space<vmem>>, vector<1x128xf32>
    %35 = vector.shape_cast %34 : vector<1x128xf32> to vector<128xf32>
    %36 = vector.shape_cast %35 : vector<128xf32> to vector<1x128xf32>
    %37 = vector.broadcast %36 : vector<1x128xf32> to vector<256x128xf32>
    %38 = arith.addf %33, %37 : vector<256x128xf32>
    %39 = arith.truncf %38 : vector<256x128xf32> to vector<256x128xbf16>
    %c4 = arith.constant 4 : index
    %c0_21 = arith.constant 0 : index
    %c0_22 = arith.constant 0 : index
    %40 = vector.load %arg2[%c4, %c0_21, %c0_22] : memref<8x128x128xbf16, #tpu.memory_space<vmem>>, vector<1x128x128xbf16>
    %41 = vector.shape_cast %40 : vector<1x128x128xbf16> to vector<128x128xbf16>
    %cst_23 = arith.constant dense<0.000000e+00> : vector<256x128xf32>
    %42 = tpu.matmul %39, %41, %cst_23 {dimension_numbers = #tpu.dot_dimension_numbers<[1], [0], [0], [1], [0, 0, 1, 1], [], []>} : vector<256x128xbf16>, vector<128x128xbf16>, vector<256x128xf32> -> vector<256x128xf32>
    %c4_24 = arith.constant 4 : index
    %c0_25 = arith.constant 0 : index
    %43 = vector.load %arg3[%c4_24, %c0_25] : memref<8x128xf32, #tpu.memory_space<vmem>>, vector<1x128xf32>
    %44 = vector.shape_cast %43 : vector<1x128xf32> to vector<128xf32>
    %45 = vector.shape_cast %44 : vector<128xf32> to vector<1x128xf32>
    %46 = vector.broadcast %45 : vector<1x128xf32> to vector<256x128xf32>
    %47 = arith.addf %42, %46 : vector<256x128xf32>
    %48 = math.tanh %47 : vector<256x128xf32>
    %49 = arith.truncf %48 : vector<256x128xf32> to vector<256x128xbf16>
    %c5 = arith.constant 5 : index
    %c0_26 = arith.constant 0 : index
    %c0_27 = arith.constant 0 : index
    %50 = vector.load %arg2[%c5, %c0_26, %c0_27] : memref<8x128x128xbf16, #tpu.memory_space<vmem>>, vector<1x128x128xbf16>
    %51 = vector.shape_cast %50 : vector<1x128x128xbf16> to vector<128x128xbf16>
    %cst_28 = arith.constant dense<0.000000e+00> : vector<256x128xf32>
    %52 = tpu.matmul %49, %51, %cst_28 {dimension_numbers = #tpu.dot_dimension_numbers<[1], [0], [0], [1], [0, 0, 1, 1], [], []>} : vector<256x128xbf16>, vector<128x128xbf16>, vector<256x128xf32> -> vector<256x128xf32>
    %c5_29 = arith.constant 5 : index
    %c0_30 = arith.constant 0 : index
    %53 = vector.load %arg3[%c5_29, %c0_30] : memref<8x128xf32, #tpu.memory_space<vmem>>, vector<1x128xf32>
    %54 = vector.shape_cast %53 : vector<1x128xf32> to vector<128xf32>
    %55 = vector.shape_cast %54 : vector<128xf32> to vector<1x128xf32>
    %56 = vector.broadcast %55 : vector<1x128xf32> to vector<256x128xf32>
    %57 = arith.addf %52, %56 : vector<256x128xf32>
    %58 = math.tanh %57 : vector<256x128xf32>
    %59 = arith.truncf %58 : vector<256x128xf32> to vector<256x128xbf16>
    %c6 = arith.constant 6 : index
    %c0_31 = arith.constant 0 : index
    %c0_32 = arith.constant 0 : index
    %60 = vector.load %arg2[%c6, %c0_31, %c0_32] : memref<8x128x128xbf16, #tpu.memory_space<vmem>>, vector<1x128x128xbf16>
    %61 = vector.shape_cast %60 : vector<1x128x128xbf16> to vector<128x128xbf16>
    %cst_33 = arith.constant dense<0.000000e+00> : vector<256x128xf32>
    %62 = tpu.matmul %59, %61, %cst_33 {dimension_numbers = #tpu.dot_dimension_numbers<[1], [0], [0], [1], [0, 0, 1, 1], [], []>} : vector<256x128xbf16>, vector<128x128xbf16>, vector<256x128xf32> -> vector<256x128xf32>
    %c6_34 = arith.constant 6 : index
    %c0_35 = arith.constant 0 : index
    %63 = vector.load %arg3[%c6_34, %c0_35] : memref<8x128xf32, #tpu.memory_space<vmem>>, vector<1x128xf32>
    %64 = vector.shape_cast %63 : vector<1x128xf32> to vector<128xf32>
    %65 = vector.shape_cast %64 : vector<128xf32> to vector<1x128xf32>
    %66 = vector.broadcast %65 : vector<1x128xf32> to vector<256x128xf32>
    %67 = arith.addf %62, %66 : vector<256x128xf32>
    %68 = math.tanh %67 : vector<256x128xf32>
    %69 = arith.truncf %68 : vector<256x128xf32> to vector<256x128xbf16>
    %c7 = arith.constant 7 : index
    %c0_36 = arith.constant 0 : index
    %c0_37 = arith.constant 0 : index
    %70 = vector.load %arg2[%c7, %c0_36, %c0_37] : memref<8x128x128xbf16, #tpu.memory_space<vmem>>, vector<1x128x128xbf16>
    %71 = vector.shape_cast %70 : vector<1x128x128xbf16> to vector<128x128xbf16>
    %cst_38 = arith.constant dense<0.000000e+00> : vector<256x128xf32>
    %72 = tpu.matmul %69, %71, %cst_38 {dimension_numbers = #tpu.dot_dimension_numbers<[1], [0], [0], [1], [0, 0, 1, 1], [], []>} : vector<256x128xbf16>, vector<128x128xbf16>, vector<256x128xf32> -> vector<256x128xf32>
    %c7_39 = arith.constant 7 : index
    %c0_40 = arith.constant 0 : index
    %73 = vector.load %arg3[%c7_39, %c0_40] : memref<8x128xf32, #tpu.memory_space<vmem>>, vector<1x128xf32>
    %74 = vector.shape_cast %73 : vector<1x128xf32> to vector<128xf32>
    %75 = vector.shape_cast %74 : vector<128xf32> to vector<1x128xf32>
    %76 = vector.broadcast %75 : vector<1x128xf32> to vector<256x128xf32>
    %77 = arith.addf %72, %76 : vector<256x128xf32>
    %c0_41 = arith.constant 0 : index
    %c0_42 = arith.constant 0 : index
    %78 = vector.load %arg4[%c0_41, %c0_42] : memref<256x128xf32, #tpu.memory_space<vmem>>, vector<256x128xf32>
    tpu.vector_store %arg4[%c0_41, %c0_42], %77 {strides = array<i32>} : memref<256x128xf32, #tpu.memory_space<vmem>>, vector<256x128xf32>,
    return
  }
  func.func @transform_0(%arg0: i32) -> (i32, i32) {
    %c0_i32 = arith.constant 0 : i32
    %c0_i32_0 = arith.constant 0 : i32
    return %arg0, %c0_i32 : i32, i32
  }
  func.func @transform_1(%arg0: i32) -> (i32, i32, i32) {
    %c0_i32 = arith.constant 0 : i32
    %c0_i32_0 = arith.constant 0 : i32
    %c0_i32_1 = arith.constant 0 : i32
    %c0_i32_2 = arith.constant 0 : i32
    return %c0_i32, %c0_i32_0, %c0_i32_1 : i32, i32, i32
  }
  func.func @transform_2(%arg0: i32) -> (i32, i32) {
    %c0_i32 = arith.constant 0 : i32
    %c0_i32_0 = arith.constant 0 : i32
    %c0_i32_1 = arith.constant 0 : i32
    return %c0_i32, %c0_i32_0 : i32, i32
  }
  func.func @transform_3(%arg0: i32) -> (i32, i32) {
    %c0_i32 = arith.constant 0 : i32
    %c0_i32_0 = arith.constant 0 : i32
    return %arg0, %c0_i32 : i32, i32
  }
}

</mosaic_0001>

<llo_original>
// kernel: autoencoder_forward.1
$region0: #{autoencoder_forward.1}
  #allocation0 [shape = 'u32[]', space=smem, size = 0x4, offset = 0x4, fixed_abs, tag = 'smem constant byte address 0x4 - core index']
  #allocation1 [shape = 'u32[144,128]{1,0:T(1,128)}', space=vmem, size = 0x12000, scoped, tag = 'internal scratch']
  %s0 = inlined_call_operand.vmem [shape: bf16[512,128], index: 0, kind: input, shape index: {}]
  %s1 = inlined_call_operand.vmem [shape: bf16[8,128,128], index: 1, kind: input, shape index: {}]
  %s2 = inlined_call_operand.vmem [shape: f32[8,128], index: 2, kind: input, shape index: {}]
  %s3 = inlined_call_operand.hbm [shape: f32[512,128], index: 3, kind: output, shape index: {}]
  %s4 = sld [smem:[#allocation0]]
  $region45: #{autoencoder_forward.1} parent=0
    _
  %s6 = ssub.s32 1, %s4
  %s7 = scalar_select 0, %s6, %s4
  $region1: #{autoencoder_forward.1} parent=0
    #allocation2 [shape = 'u8[262144]{0}', space=vmem, size = 0x40000, scoped, tag = 'output window, operand 0']
    #allocation3 [shape = 's32[2]{0}', space=sflag, size = 0x8, scoped, tag = 'scoped memory for autoencoder_forward.1']
    %8 = vsyncpa [#allocation3], 0
    %s9 = scalar_lea.sflag [#allocation3], 1
    %10 = vsyncpa %s9, 0
    loop: start=0, step=1, limit=4
    $region2: #{autoencoder_forward.1} parent=1 // loop_pre_header
      _
    $region3: #{autoencoder_forward.1} parent=1 // loop_header
      %s12 = sphi 0, %s16
      %p13 = scmp.ge.s32.totalorder %s12, 4
      %s22 = sphi 0, %s24
      %s25 = sphi 0, %s22
      %s26 = sphi 0, %s25
      %s42 = sphi 0, %s26
      %s46 = sphi 0, %s46
      %s48 = sphi 0, %s46
      %s49 = sphi 0, %s48
      %s63 = sphi 0, %s49
      %s67 = sphi 0, %s67
      %s69 = sphi 0, %s67
      %s70 = sphi 0, %s69
      %s84 = sphi 0, %s70
      %s90 = sphi 0, %s92
      %s93 = sphi 0, %s90
      %s94 = sphi 0, %s93
      %s110 = sphi 0, %s94
    $region4: #{autoencoder_forward.1} parent=1 // loop_header_branch
      %15 = sbr.rel (%p13) target = $region8
    $region5: #{autoencoder_forward.1} parent=1 // loop_body
      %s17 = ssub.s32 %s12, 1
      %s18 = ssub.s32 %s12, 2
      %s19 = sadd.s32 %s12, 1
      %s20 = ssub.s32 %s12, %s19
      %p21 = scmp.eq.s32.totalorder %s20, 0
      %s23 = sadd.s32 %s22, 1
      %s24 = scalar_select %p21, %s22, %s23
      %p27 = pneg %p21
      %p28 = scmp.eq.s32.totalorder %s12, 1
      %p29 = por %p27, %p28
      %p30 = scmp.ne.s32.totalorder %s22, %s25
      %p31 = scmp.eq.s32.totalorder %s12, 0
      %p32 = por %p30, %p31
      %p33 = scmp.ne.s32.totalorder %s22, %s25
      %p34 = scmp.eq.s32.totalorder %s17, 1
      %p35 = por %p33, %p34
      %p36 = scmp.ne.s32.totalorder %s25, %s26
      %p37 = scmp.eq.s32.totalorder %s17, 0
      %p38 = por %p36, %p37
      %p39 = scmp.ne.s32.totalorder %s25, %s26
      %p40 = scmp.eq.s32.totalorder %s18, 1
      %p41 = por %p39, %p40
      %p43 = scmp.ne.s32.totalorder %s26, %s42
      %p44 = scmp.eq.s32.totalorder %s18, 0
      %p45 = por %p43, %p44
      %s47 = sadd.s32 %s46, 1
      %p50 = scmp.eq.s32.totalorder %s12, 1
      %p51 = scmp.ne.s32.totalorder %s46, %s48
      %p52 = scmp.eq.s32.totalorder %s12, 0
      %p53 = por %p51, %p52
      %p54 = scmp.ne.s32.totalorder %s46, %s48
      %p55 = scmp.eq.s32.totalorder %s17, 1
      %p56 = por %p54, %p55
      %p57 = scmp.ne.s32.totalorder %s48, %s49
      %p58 = scmp.eq.s32.totalorder %s17, 0
      %p59 = por %p57, %p58
      %p60 = scmp.ne.s32.totalorder %s48, %s49
      %p61 = scmp.eq.s32.totalorder %s18, 1
      %p62 = por %p60, %p61
      %p64 = scmp.ne.s32.totalorder %s49, %s63
      %p65 = scmp.eq.s32.totalorder %s18, 0
      %p66 = por %p64, %p65
      %s68 = sadd.s32 %s67, 1
      %p71 = scmp.eq.s32.totalorder %s12, 1
      %p72 = scmp.ne.s32.totalorder %s67, %s69
      %p73 = scmp.eq.s32.totalorder %s12, 0
      %p74 = por %p72, %p73
      %p75 = scmp.ne.s32.totalorder %s67, %s69
      %p76 = scmp.eq.s32.totalorder %s17, 1
      %p77 = por %p75, %p76
      %p78 = scmp.ne.s32.totalorder %s69, %s70
      %p79 = scmp.eq.s32.totalorder %s17, 0
      %p80 = por %p78, %p79
      %p81 = scmp.ne.s32.totalorder %s69, %s70
      %p82 = scmp.eq.s32.totalorder %s18, 1
      %p83 = por %p81, %p82
      %p85 = scmp.ne.s32.totalorder %s70, %s84
      %p86 = scmp.eq.s32.totalorder %s18, 0
      %p87 = por %p85, %p86
      %s88 = ssub.s32 %s12, %s19
      %p89 = scmp.eq.s32.totalorder %s88, 0
      %s91 = sadd.s32 %s90, 1
      %s92 = scalar_select %p89, %s90, %s91
      %p95 = pneg %p89
      %p96 = scmp.eq.s32.totalorder %s12, 1
      %p97 = por %p95, %p96
      %p98 = scmp.ne.s32.totalorder %s90, %s93
      %p99 = scmp.eq.s32.totalorder %s12, 0
      %p100 = por %p98, %p99
      %p101 = scmp.ne.s32.totalorder %s90, %s93
      %p102 = scmp.eq.s32.totalorder %s17, 1
      %p103 = por %p101, %p102
      %p104 = scmp.ne.s32.totalorder %s93, %s94
      %p105 = scmp.eq.s32.totalorder %s17, 0
      %p106 = por %p104, %p105
      %p107 = scmp.ne.s32.totalorder %s93, %s94
      %p108 = scmp.eq.s32.totalorder %s18, 1
      %p109 = por %p107, %p108
      %p111 = scmp.ne.s32.totalorder %s94, %s110
      %p112 = scmp.eq.s32.totalorder %s18, 0
      %p113 = por %p111, %p112
      %p114 = scmp.le.s32.totalorder 1, %s12
      %p115 = scmp.lt.s32.totalorder %s12, 3
      %p116 = pnand %p114, %p115
      %p117 = pneg %p116
      // Predicated region
      $region9: #{autoencoder_forward.1} parent=5 // pred_check
        _
      $region10: #{autoencoder_forward.1} parent=5 // pred_check_branch
        %119 = sbr.rel (%p116) target = $region12
      $region11: #{autoencoder_forward.1} parent=5 // pred_region
        %s120 = ssub.s32 %s12, 1
        // Predicated region
        $region13: #{autoencoder_forward.1} parent=11 // pred_check
          %p121 = pneg %p59
        $region14: #{autoencoder_forward.1} parent=11 // pred_check_branch
          %123 = sbr.rel (%p121) target = $region16
        $region15: #{autoencoder_forward.1} parent=11 // pred_region
          _
        $region16: #{autoencoder_forward.1} parent=11 // pred_fallthru
          _
        // Predicated region
        $region17: #{autoencoder_forward.1} parent=11 // pred_check
          %p124 = pneg %p80
        $region18: #{autoencoder_forward.1} parent=11 // pred_check_branch
          %126 = sbr.rel (%p124) target = $region20
        $region19: #{autoencoder_forward.1} parent=11 // pred_region
          _
        $region20: #{autoencoder_forward.1} parent=11 // pred_fallthru
          _
      $region12: #{autoencoder_forward.1} parent=5 // pred_fallthru
        _
      %p127 = scmp.lt.s32.totalorder %s12, 2
      // Predicated region
      $region21: #{autoencoder_forward.1} parent=5 // pred_check
        %p128 = pneg %p127
      $region22: #{autoencoder_forward.1} parent=5 // pred_check_branch
        %130 = sbr.rel (%p128) target = $region24
      $region23: #{autoencoder_forward.1} parent=5 // pred_region
        // Predicated region
        $region25: #{autoencoder_forward.1} parent=23 // pred_check
          %p131 = pneg %p32
        $region26: #{autoencoder_forward.1} parent=23 // pred_check_branch
          %133 = sbr.rel (%p131) target = $region28
        $region27: #{autoencoder_forward.1} parent=23 // pred_region
          %s134 = smul.u32 32, %s12
          %p135 = scmp.lt.s32.totalorder %s134, 63
          %s136 = scalar_select %p135, %s134, 63
          %s137 = smul.addr %s136, 4
          %s138 = scalar_lea.vmem %s0, %s137
          %s139 = smul.u32 32, %s12
        $region28: #{autoencoder_forward.1} parent=23 // pred_fallthru
          _
      $region24: #{autoencoder_forward.1} parent=5 // pred_fallthru
        _
      %p140 = scmp.le.s32.totalorder 1, %s12
      %p141 = scmp.lt.s32.totalorder %s12, 3
      %p142 = pnand %p140, %p141
      %p143 = pneg %p142
      // Predicated region
      $region29: #{autoencoder_forward.1} parent=5 // pred_check
        _
      $region30: #{autoencoder_forward.1} parent=5 // pred_check_branch
        %145 = sbr.rel (%p142) target = $region32
      $region31: #{autoencoder_forward.1} parent=5 // pred_region
        %s146 = ssub.s32 %s12, 1
        %s147 = smul.u32 32, %s17
        %p148 = scmp.lt.s32.totalorder %s147, 63
        %s149 = scalar_select %p148, %s147, 63
        %s150 = smul.addr %s149, 4
        %s151 = scalar_lea.vmem %s0, %s150
        %p152 = pneg %p38
        %p153 = pneg %p35
        %p154 = pneg %p59
        %p155 = pneg %p56
        %p156 = pneg %p80
        %p157 = pneg %p77
        %p158 = pneg %p106
        %p159 = pneg %p103
        %s160 = sand.u32 %s93, 1
        %s161 = scalar_lea.sflag [#allocation3], %s160
        %s162 = sand.u32 %s93, 1
        %s163 = smul.addr %s162, 256
        %s164 = scalar_lea.vmem [#allocation2], %s163
        %s165 = smul.u32 32, %s17
        %p166 = scmp.lt.s32.totalorder %s165, 63
        %s167 = scalar_select %p166, %s165, 63
        %s168 = smul.addr %s167, 4
        %s169 = scalar_lea.vmem %s0, %s168
        %s170 = smul.u32 32, %s17
        %s171 = smul.u32 32, %s17
        %v173 = vld [vmem:[%s169] sm:$0xf]
        %v174 = vld [vmem:[%s169 + $0x4] sm:$0xf]
        %v175 = vld [vmem:[%s169 + $0x8] sm:$0xf]
        %v176 = vld [vmem:[%s169 + $0xc] sm:$0xf]
        %v177 = vld [vmem:[%s169 + $0x10] sm:$0xf]
        %v178 = vld [vmem:[%s169 + $0x14] sm:$0xf]
        %v179 = vld [vmem:[%s169 + $0x18] sm:$0xf]
        %v180 = vld [vmem:[%s169 + $0x1c] sm:$0xf]
        %v181 = vld [vmem:[%s169 + $0x20] sm:$0xf]
        %v182 = vld [vmem:[%s169 + $0x24] sm:$0xf]
        %v183 = vld [vmem:[%s169 + $0x28] sm:$0xf]
        %v184 = vld [vmem:[%s169 + $0x2c] sm:$0xf]
        %v185 = vld [vmem:[%s169 + $0x30] sm:$0xf]
        %v186 = vld [vmem:[%s169 + $0x34] sm:$0xf]
        %v187 = vld [vmem:[%s169 + $0x38] sm:$0xf]
        %v188 = vld [vmem:[%s169 + $0x3c] sm:$0xf]
        %v189 = vld [vmem:[%s169 + $0x40] sm:$0xf]
        %v190 = vld [vmem:[%s169 + $0x44] sm:$0xf]
        %v191 = vld [vmem:[%s169 + $0x48] sm:$0xf]
        %v192 = vld [vmem:[%s169 + $0x4c] sm:$0xf]
        %v193 = vld [vmem:[%s169 + $0x50] sm:$0xf]
        %v194 = vld [vmem:[%s169 + $0x54] sm:$0xf]
        %v195 = vld [vmem:[%s169 + $0x58] sm:$0xf]
        %v196 = vld [vmem:[%s169 + $0x5c] sm:$0xf]
        %v197 = vld [vmem:[%s169 + $0x60] sm:$0xf]
        %v198 = vld [vmem:[%s169 + $0x64] sm:$0xf]
        %v199 = vld [vmem:[%s169 + $0x68] sm:$0xf]
        %v200 = vld [vmem:[%s169 + $0x6c] sm:$0xf]
        %v201 = vld [vmem:[%s169 + $0x70] sm:$0xf]
        %v202 = vld [vmem:[%s169 + $0x74] sm:$0xf]
        %v203 = vld [vmem:[%s169 + $0x78] sm:$0xf]
        %v204 = vld [vmem:[%s169 + $0x7c] sm:$0xf]
        %v205 = vld [vmem:[%s1] sm:$0xf]
        %v206 = vld [vmem:[%s1 + $0x4] sm:$0xf]
        %v207 = vld [vmem:[%s1 + $0x8] sm:$0xf]
        %v208 = vld [vmem:[%s1 + $0xc] sm:$0xf]
        %v209 = vld [vmem:[%s1 + $0x10] sm:$0xf]
        %v210 = vld [vmem:[%s1 + $0x14] sm:$0xf]
        %v211 = vld [vmem:[%s1 + $0x18] sm:$0xf]
        %v212 = vld [vmem:[%s1 + $0x1c] sm:$0xf]
        %v213 = vld [vmem:[%s1 + $0x20] sm:$0xf]
        %v214 = vld [vmem:[%s1 + $0x24] sm:$0xf]
        %v215 = vld [vmem:[%s1 + $0x28] sm:$0xf]
        %v216 = vld [vmem:[%s1 + $0x2c] sm:$0xf]
        %v217 = vld [vmem:[%s1 + $0x30] sm:$0xf]
        %v218 = vld [vmem:[%s1 + $0x34] sm:$0xf]
        %v219 = vld [vmem:[%s1 + $0x38] sm:$0xf]
        %v220 = vld [vmem:[%s1 + $0x3c] sm:$0xf]
        %v221 = vld [vmem:[%s2] sm:$0x1]
        %v222 = vlaneseq
        %v223 = vshrl.u32 %v222, 7
        %v224 = vsub.s32 0, %v223
        %v225 = vrot.slane %v221, %v224
        %v258 = vunpack.c.l.b16 %v173
        %v259 = vunpack.c.l.b16 %v174
        %v260 = vunpack.c.l.b16 %v175
        %v261 = vunpack.c.l.b16 %v176
        %v262 = vunpack.c.l.b16 %v177
        %v263 = vunpack.c.l.b16 %v178
        %v264 = vunpack.c.l.b16 %v179
        %v265 = vunpack.c.l.b16 %v180
        %v266 = vunpack.c.l.b16 %v181
        %v267 = vunpack.c.l.b16 %v182
        %v268 = vunpack.c.l.b16 %v183
        %v269 = vunpack.c.l.b16 %v184
        %v270 = vunpack.c.l.b16 %v185
        %v271 = vunpack.c.l.b16 %v186
        %v272 = vunpack.c.l.b16 %v187
        %v273 = vunpack.c.l.b16 %v188
        %v274 = vunpack.c.l.b16 %v189
        %v275 = vunpack.c.l.b16 %v190
        %v276 = vunpack.c.l.b16 %v191
        %v277 = vunpack.c.l.b16 %v192
        %v278 = vunpack.c.l.b16 %v193
        %v279 = vunpack.c.l.b16 %v194
        %v280 = vunpack.c.l.b16 %v195
        %v281 = vunpack.c.l.b16 %v196
        %v282 = vunpack.c.l.b16 %v197
        %v283 = vunpack.c.l.b16 %v198
        %v284 = vunpack.c.l.b16 %v199
        %v285 = vunpack.c.l.b16 %v200
        %v286 = vunpack.c.l.b16 %v201
        %v287 = vunpack.c.l.b16 %v202
        %v288 = vunpack.c.l.b16 %v203
        %v289 = vunpack.c.l.b16 %v204
        %v290 = vpack.c.b16 %v259, %v258
        %v291 = vpack.c.b16 %v261, %v260
        %v292 = vpack.c.b16 %v263, %v262
        %v293 = vpack.c.b16 %v265, %v264
        %v294 = vpack.c.b16 %v267, %v266
        %v295 = vpack.c.b16 %v269, %v268
        %v296 = vpack.c.b16 %v271, %v270
        %v297 = vpack.c.b16 %v273, %v272
        %v298 = vpack.c.b16 %v275, %v274
        %v299 = vpack.c.b16 %v277, %v276
        %v300 = vpack.c.b16 %v279, %v278
        %v301 = vpack.c.b16 %v281, %v280
        %v302 = vpack.c.b16 %v283, %v282
        %v303 = vpack.c.b16 %v285, %v284
        %v304 = vpack.c.b16 %v287, %v286
        %v305 = vpack.c.b16 %v289, %v288
        %v338 = vunpack.c.l.b16 %v205
        %v339 = vunpack.c.l.b16 %v206
        %v340 = vunpack.c.l.b16 %v207
        %v341 = vunpack.c.l.b16 %v208
        %v342 = vunpack.c.l.b16 %v209
        %v343 = vunpack.c.l.b16 %v210
        %v344 = vunpack.c.l.b16 %v211
        %v345 = vunpack.c.l.b16 %v212
        %v346 = vunpack.c.l.b16 %v213
        %v347 = vunpack.c.l.b16 %v214
        %v348 = vunpack.c.l.b16 %v215
        %v349 = vunpack.c.l.b16 %v216
        %v350 = vunpack.c.l.b16 %v217
        %v351 = vunpack.c.l.b16 %v218
        %v352 = vunpack.c.l.b16 %v219
        %v353 = vunpack.c.l.b16 %v220
        %v354 = vpack.c.b16 %v339, %v338
        %v355 = vpack.c.b16 %v341, %v340
        %v356 = vpack.c.b16 %v343, %v342
        %v357 = vpack.c.b16 %v345, %v344
        %v358 = vpack.c.b16 %v347, %v346
        %v359 = vpack.c.b16 %v349, %v348
        %v360 = vpack.c.b16 %v351, %v350
        %v361 = vpack.c.b16 %v353, %v352
        %370 = vmatprep.subr.bf16.mxu0 0
        %371 = vmatpush1.bf16.msra.mxu0 %v354
        %372 = vmatprep.subr.bf16.mxu0 0
        %373 = vmatpush1.bf16.msra.mxu0 %v355
        %374 = vmatprep.subr.bf16.mxu0 0
        %375 = vmatpush1.bf16.msra.mxu0 %v356
        %376 = vmatprep.subr.bf16.mxu0 0
        %377 = vmatpush1.bf16.msra.mxu0 %v357
        %378 = vmatprep.subr.bf16.mxu0 0
        %379 = vmatpush1.bf16.msra.mxu0 %v358
        %380 = vmatprep.subr.bf16.mxu0 0
        %381 = vmatpush1.bf16.msra.mxu0 %v359
        %382 = vmatprep.subr.bf16.mxu0 0
        %383 = vmatpush1.bf16.msra.mxu0 %v360
        %384 = vmatprep.subr.bf16.mxu0 0
        %385 = vmatpush1.bf16.msra.mxu0 %v361
        %386 = vmatprep.subr.bf16.mxu0 0
        %387 = vmatpush1.bf16.msra.mxu0 0
        %388 = vmatprep.subr.bf16.mxu0 0
        %389 = vmatpush1.bf16.msra.mxu0 0
        %390 = vmatprep.subr.bf16.mxu0 0
        %391 = vmatpush1.bf16.msra.mxu0 0
        %392 = vmatprep.subr.bf16.mxu0 0
        %393 = vmatpush1.bf16.msra.mxu0 0
        %394 = vmatprep.subr.bf16.mxu0 0
        %395 = vmatpush1.bf16.msra.mxu0 0
        %396 = vmatprep.subr.bf16.mxu0 0
        %397 = vmatpush1.bf16.msra.mxu0 0
        %398 = vmatprep.subr.bf16.mxu0 0
        %399 = vmatpush1.bf16.msra.mxu0 0
        %400 = vmatprep.subr.bf16.mxu0 0
        %401 = vmatpush1.bf16.msra.mxu0 0
        %402 = vmatprep.mubr.bf16.mxu0 0
        %403 = vmatmul.mubr.bf16.gmra.mrb[0].mxu0 %v290
        %v404 = vpop.f32.mrb[0].mxu0
        %v405 = vadd.f32 %v225, %v404
        %v406 = vpop.f32.mrb[0].mxu0
        %v407 = vpop.f32.mrb[0].mxu0
        %v408 = vadd.f32 %v225, %v407
        %v409 = vpop.f32.mrb[0].mxu0
        %410 = vmatprep.mubr.bf16.mxu0 0
        %411 = vmatmul.mubr.bf16.gmra.mrb[0].mxu0 %v291
        %v412 = vpop.f32.mrb[0].mxu0
        %v413 = vadd.f32 %v225, %v412
        %v414 = vpop.f32.mrb[0].mxu0
        %v415 = vpop.f32.mrb[0].mxu0
        %v416 = vadd.f32 %v225, %v415
        %v417 = vpop.f32.mrb[0].mxu0
        %418 = vmatprep.mubr.bf16.mxu0 0
        %419 = vmatmul.mubr.bf16.gmra.mrb[0].mxu0 %v292
        %v420 = vpop.f32.mrb[0].mxu0
        %v421 = vadd.f32 %v225, %v420
        %v422 = vpop.f32.mrb[0].mxu0
        %v423 = vpop.f32.mrb[0].mxu0
        %v424 = vadd.f32 %v225, %v423
        %v425 = vpop.f32.mrb[0].mxu0
        %426 = vmatprep.mubr.bf16.mxu0 0
        %427 = vmatmul.mubr.bf16.gmra.mrb[0].mxu0 %v293
        %v428 = vpop.f32.mrb[0].mxu0
        %v429 = vadd.f32 %v225, %v428
        %v430 = vpop.f32.mrb[0].mxu0
        %v431 = vpop.f32.mrb[0].mxu0
        %v432 = vadd.f32 %v225, %v431
        %v433 = vpop.f32.mrb[0].mxu0
        %434 = vmatprep.mubr.bf16.mxu0 0
        %435 = vmatmul.mubr.bf16.gmra.mrb[0].mxu0 %v294
        %v436 = vpop.f32.mrb[0].mxu0
        %v437 = vadd.f32 %v225, %v436
        %v438 = vpop.f32.mrb[0].mxu0
        %v439 = vpop.f32.mrb[0].mxu0
        %v440 = vadd.f32 %v225, %v439
        %v441 = vpop.f32.mrb[0].mxu0
        %442 = vmatprep.mubr.bf16.mxu0 0
        %443 = vmatmul.mubr.bf16.gmra.mrb[0].mxu0 %v295
        %v444 = vpop.f32.mrb[0].mxu0
        %v445 = vadd.f32 %v225, %v444
        %v446 = vpop.f32.mrb[0].mxu0
        %v447 = vpop.f32.mrb[0].mxu0
        %v448 = vadd.f32 %v225, %v447
        %v449 = vpop.f32.mrb[0].mxu0
        %450 = vmatprep.mubr.bf16.mxu0 0
        %451 = vmatmul.mubr.bf16.gmra.mrb[0].mxu0 %v296
        %v452 = vpop.f32.mrb[0].mxu0
        %v453 = vadd.f32 %v225, %v452
        %v454 = vpop.f32.mrb[0].mxu0
        %v455 = vpop.f32.mrb[0].mxu0
        %v456 = vadd.f32 %v225, %v455
        %v457 = vpop.f32.mrb[0].mxu0
        %458 = vmatprep.mubr.bf16.mxu0 0
        %459 = vmatmul.mubr.bf16.gmra.mrb[0].mxu0 %v297
        %v460 = vpop.f32.mrb[0].mxu0
        %v461 = vadd.f32 %v225, %v460
        %v462 = vpop.f32.mrb[0].mxu0
        %v463 = vpop.f32.mrb[0].mxu0
        %v464 = vadd.f32 %v225, %v463
        %v465 = vpop.f32.mrb[0].mxu0
        %466 = vmatprep.mubr.bf16.mxu0 0
        %467 = vmatmul.mubr.bf16.gmra.mrb[0].mxu0 %v298
        %v468 = vpop.f32.mrb[0].mxu0
        %v469 = vadd.f32 %v225, %v468
        %v470 = vpop.f32.mrb[0].mxu0
        %v471 = vpop.f32.mrb[0].mxu0
        %v472 = vadd.f32 %v225, %v471
        %v473 = vpop.f32.mrb[0].mxu0
        %474 = vmatprep.mubr.bf16.mxu0 0
        %475 = vmatmul.mubr.bf16.gmra.mrb[0].mxu0 %v299
        %v476 = vpop.f32.mrb[0].mxu0
        %v477 = vadd.f32 %v225, %v476
        %v478 = vpop.f32.mrb[0].mxu0
        %v479 = vpop.f32.mrb[0].mxu0
        %v480 = vadd.f32 %v225, %v479
        %v481 = vpop.f32.mrb[0].mxu0
        %482 = vmatprep.mubr.bf16.mxu0 0
        %483 = vmatmul.mubr.bf16.gmra.mrb[0].mxu0 %v300
        %v484 = vpop.f32.mrb[0].mxu0
        %v485 = vadd.f32 %v225, %v484
        %v486 = vpop.f32.mrb[0].mxu0
        %v487 = vpop.f32.mrb[0].mxu0
        %v488 = vadd.f32 %v225, %v487
        %v489 = vpop.f32.mrb[0].mxu0
        %490 = vmatprep.mubr.bf16.mxu0 0
        %491 = vmatmul.mubr.bf16.gmra.mrb[0].mxu0 %v301
        %v492 = vpop.f32.mrb[0].mxu0
        %v493 = vadd.f32 %v225, %v492
        %v494 = vpop.f32.mrb[0].mxu0
        %v495 = vpop.f32.mrb[0].mxu0
        %v496 = vadd.f32 %v225, %v495
        %v497 = vpop.f32.mrb[0].mxu0
        %498 = vmatprep.mubr.bf16.mxu0 0
        %499 = vmatmul.mubr.bf16.gmra.mrb[0].mxu0 %v302
        %v500 = vpop.f32.mrb[0].mxu0
        %v501 = vadd.f32 %v225, %v500
        %v502 = vpop.f32.mrb[0].mxu0
        %v503 = vpop.f32.mrb[0].mxu0
        %v504 = vadd.f32 %v225, %v503
        %v505 = vpop.f32.mrb[0].mxu0
        %506 = vmatprep.mubr.bf16.mxu0 0
        %507 = vmatmul.mubr.bf16.gmra.mrb[0].mxu0 %v303
        %v508 = vpop.f32.mrb[0].mxu0
        %v509 = vadd.f32 %v225, %v508
        %v510 = vpop.f32.mrb[0].mxu0
        %v511 = vpop.f32.mrb[0].mxu0
        %v512 = vadd.f32 %v225, %v511
        %v513 = vpop.f32.mrb[0].mxu0
        %514 = vmatprep.mubr.bf16.mxu0 0
        %515 = vmatmul.mubr.bf16.gmra.mrb[0].mxu0 %v304
        %v516 = vpop.f32.mrb[0].mxu0
        %v517 = vadd.f32 %v225, %v516
        %v518 = vpop.f32.mrb[0].mxu0
        %v519 = vpop.f32.mrb[0].mxu0
        %v520 = vadd.f32 %v225, %v519
        %v521 = vpop.f32.mrb[0].mxu0
        %522 = vmatprep.mubr.bf16.mxu0 0
        %523 = vmatmul.mubr.bf16.gmra.mrb[0].mxu0 %v305
        %v524 = vpop.f32.mrb[0].mxu0
        %v525 = vadd.f32 %v225, %v524
        %v526 = vpop.f32.mrb[0].mxu0
        %v527 = vpop.f32.mrb[0].mxu0
        %v528 = vadd.f32 %v225, %v527
        %v529 = vpop.f32.mrb[0].mxu0
        %530 = vdwg.mxu0
        %v531 = vtanh.pop %v405
        %v532 = vtanh.pop %v408
        %v533 = vtanh.pop %v413
        %v534 = vtanh.pop %v416
        %v535 = vtanh.pop %v421
        %v536 = vtanh.pop %v424
        %v537 = vtanh.pop %v429
        %v538 = vtanh.pop %v432
        %v539 = vtanh.pop %v437
        %v540 = vtanh.pop %v440
        %v541 = vtanh.pop %v445
        %v542 = vtanh.pop %v448
        %v543 = vtanh.pop %v453
        %v544 = vtanh.pop %v456
        %v545 = vtanh.pop %v461
        %v546 = vtanh.pop %v464
        %v547 = vtanh.pop %v469
        %v548 = vtanh.pop %v472
        %v549 = vtanh.pop %v477
        %v550 = vtanh.pop %v480
        %v551 = vtanh.pop %v485
        %v552 = vtanh.pop %v488
        %v553 = vtanh.pop %v493
        %v554 = vtanh.pop %v496
        %v555 = vtanh.pop %v501
        %v556 = vtanh.pop %v504
        %v557 = vtanh.pop %v509
        %v558 = vtanh.pop %v512
        %v559 = vtanh.pop %v517
        %v560 = vtanh.pop %v520
        %v561 = vtanh.pop %v525
        %v562 = vtanh.pop %v528
        %v563 = vpack.c.bf16 %v532, %v531
        %v564 = vpack.c.bf16 %v534, %v533
        %v565 = vpack.c.bf16 %v536, %v535
        %v566 = vpack.c.bf16 %v538, %v537
        %v567 = vpack.c.bf16 %v540, %v539
        %v568 = vpack.c.bf16 %v542, %v541
        %v569 = vpack.c.bf16 %v544, %v543
        %v570 = vpack.c.bf16 %v546, %v545
        %v571 = vpack.c.bf16 %v548, %v547
        %v572 = vpack.c.bf16 %v550, %v549
        %v573 = vpack.c.bf16 %v552, %v551
        %v574 = vpack.c.bf16 %v554, %v553
        %v575 = vpack.c.bf16 %v556, %v555
        %v576 = vpack.c.bf16 %v558, %v557
        %v577 = vpack.c.bf16 %v560, %v559
        %v578 = vpack.c.bf16 %v562, %v561
        %s579 = scalar_lea.vmem %s1, 64
        %v580 = vld [vmem:[%s579] sm:$0xf]
        %v581 = vld [vmem:[%s579 + $0x4] sm:$0xf]
        %v582 = vld [vmem:[%s579 + $0x8] sm:$0xf]
        %v583 = vld [vmem:[%s579 + $0xc] sm:$0xf]
        %v584 = vld [vmem:[%s579 + $0x10] sm:$0xf]
        %v585 = vld [vmem:[%s579 + $0x14] sm:$0xf]
        %v586 = vld [vmem:[%s579 + $0x18] sm:$0xf]
        %v587 = vld [vmem:[%s579 + $0x1c] sm:$0xf]
        %v588 = vld [vmem:[%s579 + $0x20] sm:$0xf]
        %v589 = vld [vmem:[%s579 + $0x24] sm:$0xf]
        %v590 = vld [vmem:[%s579 + $0x28] sm:$0xf]
        %v591 = vld [vmem:[%s579 + $0x2c] sm:$0xf]
        %v592 = vld [vmem:[%s579 + $0x30] sm:$0xf]
        %v593 = vld [vmem:[%s579 + $0x34] sm:$0xf]
        %v594 = vld [vmem:[%s579 + $0x38] sm:$0xf]
        %v595 = vld [vmem:[%s579 + $0x3c] sm:$0xf]
        %v596 = vld [vmem:[%s2 + $0x1] sm:$0x1]
        %v597 = vlaneseq
        %v598 = vshrl.u32 %v597, 7
        %v599 = vsub.s32 0, %v598
        %v600 = vrot.slane %v596, %v599
        %v617 = vunpack.c.l.b16 %v580
        %v618 = vunpack.c.l.b16 %v581
        %v619 = vunpack.c.l.b16 %v582
        %v620 = vunpack.c.l.b16 %v583
        %v621 = vunpack.c.l.b16 %v584
        %v622 = vunpack.c.l.b16 %v585
        %v623 = vunpack.c.l.b16 %v586
        %v624 = vunpack.c.l.b16 %v587
        %v625 = vunpack.c.l.b16 %v588
        %v626 = vunpack.c.l.b16 %v589
        %v627 = vunpack.c.l.b16 %v590
        %v628 = vunpack.c.l.b16 %v591
        %v629 = vunpack.c.l.b16 %v592
        %v630 = vunpack.c.l.b16 %v593
        %v631 = vunpack.c.l.b16 %v594
        %v632 = vunpack.c.l.b16 %v595
        %v633 = vpack.c.b16 %v618, %v617
        %v634 = vpack.c.b16 %v620, %v619
        %v635 = vpack.c.b16 %v622, %v621
        %v636 = vpack.c.b16 %v624, %v623
        %v637 = vpack.c.b16 %v626, %v625
        %v638 = vpack.c.b16 %v628, %v627
        %v639 = vpack.c.b16 %v630, %v629
        %v640 = vpack.c.b16 %v632, %v631
        %649 = vmatprep.subr.bf16.mxu0 0
        %650 = vmatpush1.bf16.msra.mxu0 %v633
        %651 = vmatprep.subr.bf16.mxu0 0
        %652 = vmatpush1.bf16.msra.mxu0 %v634
        %653 = vmatprep.subr.bf16.mxu0 0
        %654 = vmatpush1.bf16.msra.mxu0 %v635
        %655 = vmatprep.subr.bf16.mxu0 0
        %656 = vmatpush1.bf16.msra.mxu0 %v636
        %657 = vmatprep.subr.bf16.mxu0 0
        %658 = vmatpush1.bf16.msra.mxu0 %v637
        %659 = vmatprep.subr.bf16.mxu0 0
        %660 = vmatpush1.bf16.msra.mxu0 %v638
        %661 = vmatprep.subr.bf16.mxu0 0
        %662 = vmatpush1.bf16.msra.mxu0 %v639
        %663 = vmatprep.subr.bf16.mxu0 0
        %664 = vmatpush1.bf16.msra.mxu0 %v640
        %665 = vmatprep.subr.bf16.mxu0 0
        %666 = vmatpush1.bf16.msra.mxu0 0
        %667 = vmatprep.subr.bf16.mxu0 0
        %668 = vmatpush1.bf16.msra.mxu0 0
        %669 = vmatprep.subr.bf16.mxu0 0
        %670 = vmatpush1.bf16.msra.mxu0 0
        %671 = vmatprep.subr.bf16.mxu0 0
        %672 = vmatpush1.bf16.msra.mxu0 0
        %673 = vmatprep.subr.bf16.mxu0 0
        %674 = vmatpush1.bf16.msra.mxu0 0
        %675 = vmatprep.subr.bf16.mxu0 0
        %676 = vmatpush1.bf16.msra.mxu0 0
        %677 = vmatprep.subr.bf16.mxu0 0
        %678 = vmatpush1.bf16.msra.mxu0 0
        %679 = vmatprep.subr.bf16.mxu0 0
        %680 = vmatpush1.bf16.msra.mxu0 0
        %681 = vmatprep.mubr.bf16.mxu0 0
        %682 = vmatmul.mubr.bf16.gmra.mrb[0].mxu0 %v563
        %v683 = vpop.f32.mrb[0].mxu0
        %v684 = vadd.f32 %v600, %v683
        %v685 = vpop.f32.mrb[0].mxu0
        %v686 = vpop.f32.mrb[0].mxu0
        %v687 = vadd.f32 %v600, %v686
        %v688 = vpop.f32.mrb[0].mxu0
        %689 = vmatprep.mubr.bf16.mxu0 0
        %690 = vmatmul.mubr.bf16.gmra.mrb[0].mxu0 %v564
        %v691 = vpop.f32.mrb[0].mxu0
        %v692 = vadd.f32 %v600, %v691
        %v693 = vpop.f32.mrb[0].mxu0
        %v694 = vpop.f32.mrb[0].mxu0
        %v695 = vadd.f32 %v600, %v694
        %v696 = vpop.f32.mrb[0].mxu0
        %697 = vmatprep.mubr.bf16.mxu0 0
        %698 = vmatmul.mubr.bf16.gmra.mrb[0].mxu0 %v565
        %v699 = vpop.f32.mrb[0].mxu0
        %v700 = vadd.f32 %v600, %v699
        %v701 = vpop.f32.mrb[0].mxu0
        %v702 = vpop.f32.mrb[0].mxu0
        %v703 = vadd.f32 %v600, %v702
        %v704 = vpop.f32.mrb[0].mxu0
        %705 = vmatprep.mubr.bf16.mxu0 0
        %706 = vmatmul.mubr.bf16.gmra.mrb[0].mxu0 %v566
        %v707 = vpop.f32.mrb[0].mxu0
        %v708 = vadd.f32 %v600, %v707
        %v709 = vpop.f32.mrb[0].mxu0
        %v710 = vpop.f32.mrb[0].mxu0
        %v711 = vadd.f32 %v600, %v710
        %v712 = vpop.f32.mrb[0].mxu0
        %713 = vmatprep.mubr.bf16.mxu0 0
        %714 = vmatmul.mubr.bf16.gmra.mrb[0].mxu0 %v567
        %v715 = vpop.f32.mrb[0].mxu0
        %v716 = vadd.f32 %v600, %v715
        %v717 = vpop.f32.mrb[0].mxu0
        %v718 = vpop.f32.mrb[0].mxu0
        %v719 = vadd.f32 %v600, %v718
        %v720 = vpop.f32.mrb[0].mxu0
        %721 = vmatprep.mubr.bf16.mxu0 0
        %722 = vmatmul.mubr.bf16.gmra.mrb[0].mxu0 %v568
        %v723 = vpop.f32.mrb[0].mxu0
        %v724 = vadd.f32 %v600, %v723
        %v725 = vpop.f32.mrb[0].mxu0
        %v726 = vpop.f32.mrb[0].mxu0
        %v727 = vadd.f32 %v600, %v726
        %v728 = vpop.f32.mrb[0].mxu0
        %729 = vmatprep.mubr.bf16.mxu0 0
        %730 = vmatmul.mubr.bf16.gmra.mrb[0].mxu0 %v569
        %v731 = vpop.f32.mrb[0].mxu0
        %v732 = vadd.f32 %v600, %v731
        %v733 = vpop.f32.mrb[0].mxu0
        %v734 = vpop.f32.mrb[0].mxu0
        %v735 = vadd.f32 %v600, %v734
        %v736 = vpop.f32.mrb[0].mxu0
        %737 = vmatprep.mubr.bf16.mxu0 0
        %738 = vmatmul.mubr.bf16.gmra.mrb[0].mxu0 %v570
        %v739 = vpop.f32.mrb[0].mxu0
        %v740 = vadd.f32 %v600, %v739
        %v741 = vpop.f32.mrb[0].mxu0
        %v742 = vpop.f32.mrb[0].mxu0
        %v743 = vadd.f32 %v600, %v742
        %v744 = vpop.f32.mrb[0].mxu0
        %745 = vmatprep.mubr.bf16.mxu0 0
        %746 = vmatmul.mubr.bf16.gmra.mrb[0].mxu0 %v571
        %v747 = vpop.f32.mrb[0].mxu0
        %v748 = vadd.f32 %v600, %v747
        %v749 = vpop.f32.mrb[0].mxu0
        %v750 = vpop.f32.mrb[0].mxu0
        %v751 = vadd.f32 %v600, %v750
        %v752 = vpop.f32.mrb[0].mxu0
        %753 = vmatprep.mubr.bf16.mxu0 0
        %754 = vmatmul.mubr.bf16.gmra.mrb[0].mxu0 %v572
        %v755 = vpop.f32.mrb[0].mxu0
        %v756 = vadd.f32 %v600, %v755
        %v757 = vpop.f32.mrb[0].mxu0
        %v758 = vpop.f32.mrb[0].mxu0
        %v759 = vadd.f32 %v600, %v758
        %v760 = vpop.f32.mrb[0].mxu0
        %761 = vmatprep.mubr.bf16.mxu0 0
        %762 = vmatmul.mubr.bf16.gmra.mrb[0].mxu0 %v573
        %v763 = vpop.f32.mrb[0].mxu0
        %v764 = vadd.f32 %v600, %v763
        %v765 = vpop.f32.mrb[0].mxu0
        %v766 = vpop.f32.mrb[0].mxu0
        %v767 = vadd.f32 %v600, %v766
        %v768 = vpop.f32.mrb[0].mxu0
        %769 = vmatprep.mubr.bf16.mxu0 0
        %770 = vmatmul.mubr.bf16.gmra.mrb[0].mxu0 %v574
        %v771 = vpop.f32.mrb[0].mxu0
        %v772 = vadd.f32 %v600, %v771
        %v773 = vpop.f32.mrb[0].mxu0
        %v774 = vpop.f32.mrb[0].mxu0
        %v775 = vadd.f32 %v600, %v774
        %v776 = vpop.f32.mrb[0].mxu0
        %777 = vmatprep.mubr.bf16.mxu0 0
        %778 = vmatmul.mubr.bf16.gmra.mrb[0].mxu0 %v575
        %v779 = vpop.f32.mrb[0].mxu0
        %v780 = vadd.f32 %v600, %v779
        %v781 = vpop.f32.mrb[0].mxu0
        %v782 = vpop.f32.mrb[0].mxu0
        %v783 = vadd.f32 %v600, %v782
        %v784 = vpop.f32.mrb[0].mxu0
        %785 = vmatprep.mubr.bf16.mxu0 0
        %786 = vmatmul.mubr.bf16.gmra.mrb[0].mxu0 %v576
        %v787 = vpop.f32.mrb[0].mxu0
        %v788 = vadd.f32 %v600, %v787
        %v789 = vpop.f32.mrb[0].mxu0
        %v790 = vpop.f32.mrb[0].mxu0
        %v791 = vadd.f32 %v600, %v790
        %v792 = vpop.f32.mrb[0].mxu0
        %793 = vmatprep.mubr.bf16.mxu0 0
        %794 = vmatmul.mubr.bf16.gmra.mrb[0].mxu0 %v577
        %v795 = vpop.f32.mrb[0].mxu0
        %v796 = vadd.f32 %v600, %v795
        %v797 = vpop.f32.mrb[0].mxu0
        %v798 = vpop.f32.mrb[0].mxu0
        %v799 = vadd.f32 %v600, %v798
        %v800 = vpop.f32.mrb[0].mxu0
        %801 = vmatprep.mubr.bf16.mxu0 0
        %802 = vmatmul.mubr.bf16.gmra.mrb[0].mxu0 %v578
        %v803 = vpop.f32.mrb[0].mxu0
        %v804 = vadd.f32 %v600, %v803
        %v805 = vpop.f32.mrb[0].mxu0
        %v806 = vpop.f32.mrb[0].mxu0
        %v807 = vadd.f32 %v600, %v806
        %v808 = vpop.f32.mrb[0].mxu0
        %809 = vdwg.mxu0
        %v810 = vtanh.pop %v684
        %v811 = vtanh.pop %v687
        %v812 = vtanh.pop %v692
        %v813 = vtanh.pop %v695
        %v814 = vtanh.pop %v700
        %v815 = vtanh.pop %v703
        %v816 = vtanh.pop %v708
        %v817 = vtanh.pop %v711
        %v818 = vtanh.pop %v716
        %v819 = vtanh.pop %v719
        %v820 = vtanh.pop %v724
        %v821 = vtanh.pop %v727
        %v822 = vtanh.pop %v732
        %v823 = vtanh.pop %v735
        %v824 = vtanh.pop %v740
        %v825 = vtanh.pop %v743
        %v826 = vtanh.pop %v748
        %v827 = vtanh.pop %v751
        %v828 = vtanh.pop %v756
        %v829 = vtanh.pop %v759
        %v830 = vtanh.pop %v764
        %v831 = vtanh.pop %v767
        %v832 = vtanh.pop %v772
        %v833 = vtanh.pop %v775
        %v834 = vtanh.pop %v780
        %v835 = vtanh.pop %v783
        %v836 = vtanh.pop %v788
        %v837 = vtanh.pop %v791
        %v838 = vtanh.pop %v796
        %v839 = vtanh.pop %v799
        %v840 = vtanh.pop %v804
        %v841 = vtanh.pop %v807
        %v842 = vpack.c.bf16 %v811, %v810
        %v843 = vpack.c.bf16 %v813, %v812
        %v844 = vpack.c.bf16 %v815, %v814
        %v845 = vpack.c.bf16 %v817, %v816
        %v846 = vpack.c.bf16 %v819, %v818
        %v847 = vpack.c.bf16 %v821, %v820
        %v848 = vpack.c.bf16 %v823, %v822
        %v849 = vpack.c.bf16 %v825, %v824
        %v850 = vpack.c.bf16 %v827, %v826
        %v851 = vpack.c.bf16 %v829, %v828
        %v852 = vpack.c.bf16 %v831, %v830
        %v853 = vpack.c.bf16 %v833, %v832
        %v854 = vpack.c.bf16 %v835, %v834
        %v855 = vpack.c.bf16 %v837, %v836
        %v856 = vpack.c.bf16 %v839, %v838
        %v857 = vpack.c.bf16 %v841, %v840
        %s858 = scalar_lea.vmem %s1, 128
        %v859 = vld [vmem:[%s858] sm:$0xf]
        %v860 = vld [vmem:[%s858 + $0x4] sm:$0xf]
        %v861 = vld [vmem:[%s858 + $0x8] sm:$0xf]
        %v862 = vld [vmem:[%s858 + $0xc] sm:$0xf]
        %v863 = vld [vmem:[%s858 + $0x10] sm:$0xf]
        %v864 = vld [vmem:[%s858 + $0x14] sm:$0xf]
        %v865 = vld [vmem:[%s858 + $0x18] sm:$0xf]
        %v866 = vld [vmem:[%s858 + $0x1c] sm:$0xf]
        %v867 = vld [vmem:[%s858 + $0x20] sm:$0xf]
        %v868 = vld [vmem:[%s858 + $0x24] sm:$0xf]
        %v869 = vld [vmem:[%s858 + $0x28] sm:$0xf]
        %v870 = vld [vmem:[%s858 + $0x2c] sm:$0xf]
        %v871 = vld [vmem:[%s858 + $0x30] sm:$0xf]
        %v872 = vld [vmem:[%s858 + $0x34] sm:$0xf]
        %v873 = vld [vmem:[%s858 + $0x38] sm:$0xf]
        %v874 = vld [vmem:[%s858 + $0x3c] sm:$0xf]
        %v875 = vld [vmem:[%s2 + $0x2] sm:$0x1]
        %v876 = vlaneseq
        %v877 = vshrl.u32 %v876, 7
        %v878 = vsub.s32 0, %v877
        %v879 = vrot.slane %v875, %v878
        %v896 = vunpack.c.l.b16 %v859
        %v897 = vunpack.c.l.b16 %v860
        %v898 = vunpack.c.l.b16 %v861
        %v899 = vunpack.c.l.b16 %v862
        %v900 = vunpack.c.l.b16 %v863
        %v901 = vunpack.c.l.b16 %v864
        %v902 = vunpack.c.l.b16 %v865
        %v903 = vunpack.c.l.b16 %v866
        %v904 = vunpack.c.l.b16 %v867
        %v905 = vunpack.c.l.b16 %v868
        %v906 = vunpack.c.l.b16 %v869
        %v907 = vunpack.c.l.b16 %v870
        %v908 = vunpack.c.l.b16 %v871
        %v909 = vunpack.c.l.b16 %v872
        %v910 = vunpack.c.l.b16 %v873
        %v911 = vunpack.c.l.b16 %v874
        %v912 = vpack.c.b16 %v897, %v896
        %v913 = vpack.c.b16 %v899, %v898
        %v914 = vpack.c.b16 %v901, %v900
        %v915 = vpack.c.b16 %v903, %v902
        %v916 = vpack.c.b16 %v905, %v904
        %v917 = vpack.c.b16 %v907, %v906
        %v918 = vpack.c.b16 %v909, %v908
        %v919 = vpack.c.b16 %v911, %v910
        %928 = vmatprep.subr.bf16.mxu0 0
        %929 = vmatpush1.bf16.msra.mxu0 %v912
        %930 = vmatprep.subr.bf16.mxu0 0
        %931 = vmatpush1.bf16.msra.mxu0 %v913
        %932 = vmatprep.subr.bf16.mxu0 0
        %933 = vmatpush1.bf16.msra.mxu0 %v914
        %934 = vmatprep.subr.bf16.mxu0 0
        %935 = vmatpush1.bf16.msra.mxu0 %v915
        %936 = vmatprep.subr.bf16.mxu0 0
        %937 = vmatpush1.bf16.msra.mxu0 %v916
        %938 = vmatprep.subr.bf16.mxu0 0
        %939 = vmatpush1.bf16.msra.mxu0 %v917
        %940 = vmatprep.subr.bf16.mxu0 0
        %941 = vmatpush1.bf16.msra.mxu0 %v918
        %942 = vmatprep.subr.bf16.mxu0 0
        %943 = vmatpush1.bf16.msra.mxu0 %v919
        %944 = vmatprep.subr.bf16.mxu0 0
        %945 = vmatpush1.bf16.msra.mxu0 0
        %946 = vmatprep.subr.bf16.mxu0 0
        %947 = vmatpush1.bf16.msra.mxu0 0
        %948 = vmatprep.subr.bf16.mxu0 0
        %949 = vmatpush1.bf16.msra.mxu0 0
        %950 = vmatprep.subr.bf16.mxu0 0
        %951 = vmatpush1.bf16.msra.mxu0 0
        %952 = vmatprep.subr.bf16.mxu0 0
        %953 = vmatpush1.bf16.msra.mxu0 0
        %954 = vmatprep.subr.bf16.mxu0 0
        %955 = vmatpush1.bf16.msra.mxu0 0
        %956 = vmatprep.subr.bf16.mxu0 0
        %957 = vmatpush1.bf16.msra.mxu0 0
        %958 = vmatprep.subr.bf16.mxu0 0
        %959 = vmatpush1.bf16.msra.mxu0 0
        %960 = vmatprep.mubr.bf16.mxu0 0
        %961 = vmatmul.mubr.bf16.gmra.mrb[0].mxu0 %v842
        %v962 = vpop.f32.mrb[0].mxu0
        %v963 = vadd.f32 %v879, %v962
        %v964 = vpop.f32.mrb[0].mxu0
        %v965 = vpop.f32.mrb[0].mxu0
        %v966 = vadd.f32 %v879, %v965
        %v967 = vpop.f32.mrb[0].mxu0
        %968 = vmatprep.mubr.bf16.mxu0 0
        %969 = vmatmul.mubr.bf16.gmra.mrb[0].mxu0 %v843
        %v970 = vpop.f32.mrb[0].mxu0
        %v971 = vadd.f32 %v879, %v970
        %v972 = vpop.f32.mrb[0].mxu0
        %v973 = vpop.f32.mrb[0].mxu0
        %v974 = vadd.f32 %v879, %v973
        %v975 = vpop.f32.mrb[0].mxu0
        %976 = vmatprep.mubr.bf16.mxu0 0
        %977 = vmatmul.mubr.bf16.gmra.mrb[0].mxu0 %v844
        %v978 = vpop.f32.mrb[0].mxu0
        %v979 = vadd.f32 %v879, %v978
        %v980 = vpop.f32.mrb[0].mxu0
        %v981 = vpop.f32.mrb[0].mxu0
        %v982 = vadd.f32 %v879, %v981
        %v983 = vpop.f32.mrb[0].mxu0
        %984 = vmatprep.mubr.bf16.mxu0 0
        %985 = vmatmul.mubr.bf16.gmra.mrb[0].mxu0 %v845
        %v986 = vpop.f32.mrb[0].mxu0
        %v987 = vadd.f32 %v879, %v986
        %v988 = vpop.f32.mrb[0].mxu0
        %v989 = vpop.f32.mrb[0].mxu0
        %v990 = vadd.f32 %v879, %v989
        %v991 = vpop.f32.mrb[0].mxu0
        %992 = vmatprep.mubr.bf16.mxu0 0
        %993 = vmatmul.mubr.bf16.gmra.mrb[0].mxu0 %v846
        %v994 = vpop.f32.mrb[0].mxu0
        %v995 = vadd.f32 %v879, %v994
        %v996 = vpop.f32.mrb[0].mxu0
        %v997 = vpop.f32.mrb[0].mxu0
        %v998 = vadd.f32 %v879, %v997
        %v999 = vpop.f32.mrb[0].mxu0
        %1000 = vmatprep.mubr.bf16.mxu0 0
        %1001 = vmatmul.mubr.bf16.gmra.mrb[0].mxu0 %v847
        %v1002 = vpop.f32.mrb[0].mxu0
        %v1003 = vadd.f32 %v879, %v1002
        %v1004 = vpop.f32.mrb[0].mxu0
        %v1005 = vpop.f32.mrb[0].mxu0
        %v1006 = vadd.f32 %v879, %v1005
        %v1007 = vpop.f32.mrb[0].mxu0
        %1008 = vmatprep.mubr.bf16.mxu0 0
        %1009 = vmatmul.mubr.bf16.gmra.mrb[0].mxu0 %v848
        %v1010 = vpop.f32.mrb[0].mxu0
        %v1011 = vadd.f32 %v879, %v1010
        %v1012 = vpop.f32.mrb[0].mxu0
        %v1013 = vpop.f32.mrb[0].mxu0
        %v1014 = vadd.f32 %v879, %v1013
        %v1015 = vpop.f32.mrb[0].mxu0
        %1016 = vmatprep.mubr.bf16.mxu0 0
        %1017 = vmatmul.mubr.bf16.gmra.mrb[0].mxu0 %v849
        %v1018 = vpop.f32.mrb[0].mxu0
        %v1019 = vadd.f32 %v879, %v1018
        %v1020 = vpop.f32.mrb[0].mxu0
        %v1021 = vpop.f32.mrb[0].mxu0
        %v1022 = vadd.f32 %v879, %v1021
        %v1023 = vpop.f32.mrb[0].mxu0
        %1024 = vmatprep.mubr.bf16.mxu0 0
        %1025 = vmatmul.mubr.bf16.gmra.mrb[0].mxu0 %v850
        %v1026 = vpop.f32.mrb[0].mxu0
        %v1027 = vadd.f32 %v879, %v1026
        %v1028 = vpop.f32.mrb[0].mxu0
        %v1029 = vpop.f32.mrb[0].mxu0
        %v1030 = vadd.f32 %v879, %v1029
        %v1031 = vpop.f32.mrb[0].mxu0
        %1032 = vmatprep.mubr.bf16.mxu0 0
        %1033 = vmatmul.mubr.bf16.gmra.mrb[0].mxu0 %v851
        %v1034 = vpop.f32.mrb[0].mxu0
        %v1035 = vadd.f32 %v879, %v1034
        %v1036 = vpop.f32.mrb[0].mxu0
        %v1037 = vpop.f32.mrb[0].mxu0
        %v1038 = vadd.f32 %v879, %v1037
        %v1039 = vpop.f32.mrb[0].mxu0
        %1040 = vmatprep.mubr.bf16.mxu0 0
        %1041 = vmatmul.mubr.bf16.gmra.mrb[0].mxu0 %v852
        %v1042 = vpop.f32.mrb[0].mxu0
        %v1043 = vadd.f32 %v879, %v1042
        %v1044 = vpop.f32.mrb[0].mxu0
        %v1045 = vpop.f32.mrb[0].mxu0
        %v1046 = vadd.f32 %v879, %v1045
        %v1047 = vpop.f32.mrb[0].mxu0
        %1048 = vmatprep.mubr.bf16.mxu0 0
        %1049 = vmatmul.mubr.bf16.gmra.mrb[0].mxu0 %v853
        %v1050 = vpop.f32.mrb[0].mxu0
        %v1051 = vadd.f32 %v879, %v1050
        %v1052 = vpop.f32.mrb[0].mxu0
        %v1053 = vpop.f32.mrb[0].mxu0
        %v1054 = vadd.f32 %v879, %v1053
        %v1055 = vpop.f32.mrb[0].mxu0
        %1056 = vmatprep.mubr.bf16.mxu0 0
        %1057 = vmatmul.mubr.bf16.gmra.mrb[0].mxu0 %v854
        %v1058 = vpop.f32.mrb[0].mxu0
        %v1059 = vadd.f32 %v879, %v1058
        %v1060 = vpop.f32.mrb[0].mxu0
        %v1061 = vpop.f32.mrb[0].mxu0
        %v1062 = vadd.f32 %v879, %v1061
        %v1063 = vpop.f32.mrb[0].mxu0
        %1064 = vmatprep.mubr.bf16.mxu0 0
        %1065 = vmatmul.mubr.bf16.gmra.mrb[0].mxu0 %v855
        %v1066 = vpop.f32.mrb[0].mxu0
        %v1067 = vadd.f32 %v879, %v1066
        %v1068 = vpop.f32.mrb[0].mxu0
        %v1069 = vpop.f32.mrb[0].mxu0
        %v1070 = vadd.f32 %v879, %v1069
        %v1071 = vpop.f32.mrb[0].mxu0
        %1072 = vmatprep.mubr.bf16.mxu0 0
        %1073 = vmatmul.mubr.bf16.gmra.mrb[0].mxu0 %v856
        %v1074 = vpop.f32.mrb[0].mxu0
        %v1075 = vadd.f32 %v879, %v1074
        %v1076 = vpop.f32.mrb[0].mxu0
        %v1077 = vpop.f32.mrb[0].mxu0
        %v1078 = vadd.f32 %v879, %v1077
        %v1079 = vpop.f32.mrb[0].mxu0
        %1080 = vmatprep.mubr.bf16.mxu0 0
        %1081 = vmatmul.mubr.bf16.gmra.mrb[0].mxu0 %v857
        %v1082 = vpop.f32.mrb[0].mxu0
        %v1083 = vadd.f32 %v879, %v1082
        %v1084 = vpop.f32.mrb[0].mxu0
        %v1085 = vpop.f32.mrb[0].mxu0
        %v1086 = vadd.f32 %v879, %v1085
        %v1087 = vpop.f32.mrb[0].mxu0
        %1088 = vdwg.mxu0
        %v1089 = vtanh.pop %v963
        %v1090 = vtanh.pop %v966
        %v1091 = vtanh.pop %v971
        %v1092 = vtanh.pop %v974
        %v1093 = vtanh.pop %v979
        %v1094 = vtanh.pop %v982
        %v1095 = vtanh.pop %v987
        %v1096 = vtanh.pop %v990
        %v1097 = vtanh.pop %v995
        %v1098 = vtanh.pop %v998
        %v1099 = vtanh.pop %v1003
        %v1100 = vtanh.pop %v1006
        %v1101 = vtanh.pop %v1011
        %v1102 = vtanh.pop %v1014
        %v1103 = vtanh.pop %v1019
        %v1104 = vtanh.pop %v1022
        %v1105 = vtanh.pop %v1027
        %v1106 = vtanh.pop %v1030
        %v1107 = vtanh.pop %v1035
        %v1108 = vtanh.pop %v1038
        %v1109 = vtanh.pop %v1043
        %v1110 = vtanh.pop %v1046
        %v1111 = vtanh.pop %v1051
        %v1112 = vtanh.pop %v1054
        %v1113 = vtanh.pop %v1059
        %v1114 = vtanh.pop %v1062
        %v1115 = vtanh.pop %v1067
        %v1116 = vtanh.pop %v1070
        %v1117 = vtanh.pop %v1075
        %v1118 = vtanh.pop %v1078
        %v1119 = vtanh.pop %v1083
        %v1120 = vtanh.pop %v1086
        %v1121 = vpack.c.bf16 %v1090, %v1089
        %v1122 = vpack.c.bf16 %v1092, %v1091
        %v1123 = vpack.c.bf16 %v1094, %v1093
        %v1124 = vpack.c.bf16 %v1096, %v1095
        %v1125 = vpack.c.bf16 %v1098, %v1097
        %v1126 = vpack.c.bf16 %v1100, %v1099
        %v1127 = vpack.c.bf16 %v1102, %v1101
        %v1128 = vpack.c.bf16 %v1104, %v1103
        %v1129 = vpack.c.bf16 %v1106, %v1105
        %v1130 = vpack.c.bf16 %v1108, %v1107
        %v1131 = vpack.c.bf16 %v1110, %v1109
        %v1132 = vpack.c.bf16 %v1112, %v1111
        %v1133 = vpack.c.bf16 %v1114, %v1113
        %v1134 = vpack.c.bf16 %v1116, %v1115
        %v1135 = vpack.c.bf16 %v1118, %v1117
        %v1136 = vpack.c.bf16 %v1120, %v1119
        %s1137 = scalar_lea.vmem %s1, 192
        %v1138 = vld [vmem:[%s1137] sm:$0xf]
        %v1139 = vld [vmem:[%s1137 + $0x4] sm:$0xf]
        %v1140 = vld [vmem:[%s1137 + $0x8] sm:$0xf]
        %v1141 = vld [vmem:[%s1137 + $0xc] sm:$0xf]
        %v1142 = vld [vmem:[%s1137 + $0x10] sm:$0xf]
        %v1143 = vld [vmem:[%s1137 + $0x14] sm:$0xf]
        %v1144 = vld [vmem:[%s1137 + $0x18] sm:$0xf]
        %v1145 = vld [vmem:[%s1137 + $0x1c] sm:$0xf]
        %v1146 = vld [vmem:[%s1137 + $0x20] sm:$0xf]
        %v1147 = vld [vmem:[%s1137 + $0x24] sm:$0xf]
        %v1148 = vld [vmem:[%s1137 + $0x28] sm:$0xf]
        %v1149 = vld [vmem:[%s1137 + $0x2c] sm:$0xf]
        %v1150 = vld [vmem:[%s1137 + $0x30] sm:$0xf]
        %v1151 = vld [vmem:[%s1137 + $0x34] sm:$0xf]
        %v1152 = vld [vmem:[%s1137 + $0x38] sm:$0xf]
        %v1153 = vld [vmem:[%s1137 + $0x3c] sm:$0xf]
        %v1154 = vld [vmem:[%s2 + $0x3] sm:$0x1]
        %v1155 = vlaneseq
        %v1156 = vshrl.u32 %v1155, 7
        %v1157 = vsub.s32 0, %v1156
        %v1158 = vrot.slane %v1154, %v1157
        %v1175 = vunpack.c.l.b16 %v1138
        %v1176 = vunpack.c.l.b16 %v1139
        %v1177 = vunpack.c.l.b16 %v1140
        %v1178 = vunpack.c.l.b16 %v1141
        %v1179 = vunpack.c.l.b16 %v1142
        %v1180 = vunpack.c.l.b16 %v1143
        %v1181 = vunpack.c.l.b16 %v1144
        %v1182 = vunpack.c.l.b16 %v1145
        %v1183 = vunpack.c.l.b16 %v1146
        %v1184 = vunpack.c.l.b16 %v1147
        %v1185 = vunpack.c.l.b16 %v1148
        %v1186 = vunpack.c.l.b16 %v1149
        %v1187 = vunpack.c.l.b16 %v1150
        %v1188 = vunpack.c.l.b16 %v1151
        %v1189 = vunpack.c.l.b16 %v1152
        %v1190 = vunpack.c.l.b16 %v1153
        %v1191 = vpack.c.b16 %v1176, %v1175
        %v1192 = vpack.c.b16 %v1178, %v1177
        %v1193 = vpack.c.b16 %v1180, %v1179
        %v1194 = vpack.c.b16 %v1182, %v1181
        %v1195 = vpack.c.b16 %v1184, %v1183
        %v1196 = vpack.c.b16 %v1186, %v1185
        %v1197 = vpack.c.b16 %v1188, %v1187
        %v1198 = vpack.c.b16 %v1190, %v1189
        %1207 = vmatprep.subr.bf16.mxu0 0
        %1208 = vmatpush1.bf16.msra.mxu0 %v1191
        %1209 = vmatprep.subr.bf16.mxu0 0
        %1210 = vmatpush1.bf16.msra.mxu0 %v1192
        %1211 = vmatprep.subr.bf16.mxu0 0
        %1212 = vmatpush1.bf16.msra.mxu0 %v1193
        %1213 = vmatprep.subr.bf16.mxu0 0
        %1214 = vmatpush1.bf16.msra.mxu0 %v1194
        %1215 = vmatprep.subr.bf16.mxu0 0
        %1216 = vmatpush1.bf16.msra.mxu0 %v1195
        %1217 = vmatprep.subr.bf16.mxu0 0
        %1218 = vmatpush1.bf16.msra.mxu0 %v1196
        %1219 = vmatprep.subr.bf16.mxu0 0
        %1220 = vmatpush1.bf16.msra.mxu0 %v1197
        %1221 = vmatprep.subr.bf16.mxu0 0
        %1222 = vmatpush1.bf16.msra.mxu0 %v1198
        %1223 = vmatprep.subr.bf16.mxu0 0
        %1224 = vmatpush1.bf16.msra.mxu0 0
        %1225 = vmatprep.subr.bf16.mxu0 0
        %1226 = vmatpush1.bf16.msra.mxu0 0
        %1227 = vmatprep.subr.bf16.mxu0 0
        %1228 = vmatpush1.bf16.msra.mxu0 0
        %1229 = vmatprep.subr.bf16.mxu0 0
        %1230 = vmatpush1.bf16.msra.mxu0 0
        %1231 = vmatprep.subr.bf16.mxu0 0
        %1232 = vmatpush1.bf16.msra.mxu0 0
        %1233 = vmatprep.subr.bf16.mxu0 0
        %1234 = vmatpush1.bf16.msra.mxu0 0
        %1235 = vmatprep.subr.bf16.mxu0 0
        %1236 = vmatpush1.bf16.msra.mxu0 0
        %1237 = vmatprep.subr.bf16.mxu0 0
        %1238 = vmatpush1.bf16.msra.mxu0 0
        %1239 = vmatprep.mubr.bf16.mxu0 0
        %1240 = vmatmul.mubr.bf16.gmra.mrb[0].mxu0 %v1121
        %v1241 = vpop.f32.mrb[0].mxu0
        %v1242 = vadd.f32 %v1158, %v1241
        %v1243 = vpop.f32.mrb[0].mxu0
        %v1244 = vpop.f32.mrb[0].mxu0
        %v1245 = vadd.f32 %v1158, %v1244
        %v1246 = vpop.f32.mrb[0].mxu0
        %1247 = vmatprep.mubr.bf16.mxu0 0
        %1248 = vmatmul.mubr.bf16.gmra.mrb[0].mxu0 %v1122
        %v1249 = vpop.f32.mrb[0].mxu0
        %v1250 = vadd.f32 %v1158, %v1249
        %v1251 = vpop.f32.mrb[0].mxu0
        %v1252 = vpop.f32.mrb[0].mxu0
        %v1253 = vadd.f32 %v1158, %v1252
        %v1254 = vpop.f32.mrb[0].mxu0
        %1255 = vmatprep.mubr.bf16.mxu0 0
        %1256 = vmatmul.mubr.bf16.gmra.mrb[0].mxu0 %v1123
        %v1257 = vpop.f32.mrb[0].mxu0
        %v1258 = vadd.f32 %v1158, %v1257
        %v1259 = vpop.f32.mrb[0].mxu0
        %v1260 = vpop.f32.mrb[0].mxu0
        %v1261 = vadd.f32 %v1158, %v1260
        %v1262 = vpop.f32.mrb[0].mxu0
        %1263 = vmatprep.mubr.bf16.mxu0 0
        %1264 = vmatmul.mubr.bf16.gmra.mrb[0].mxu0 %v1124
        %v1265 = vpop.f32.mrb[0].mxu0
        %v1266 = vadd.f32 %v1158, %v1265
        %v1267 = vpop.f32.mrb[0].mxu0
        %v1268 = vpop.f32.mrb[0].mxu0
        %v1269 = vadd.f32 %v1158, %v1268
        %v1270 = vpop.f32.mrb[0].mxu0
        %1271 = vmatprep.mubr.bf16.mxu0 0
        %1272 = vmatmul.mubr.bf16.gmra.mrb[0].mxu0 %v1125
        %v1273 = vpop.f32.mrb[0].mxu0
        %v1274 = vadd.f32 %v1158, %v1273
        %v1275 = vpop.f32.mrb[0].mxu0
        %v1276 = vpop.f32.mrb[0].mxu0
        %v1277 = vadd.f32 %v1158, %v1276
        %v1278 = vpop.f32.mrb[0].mxu0
        %1279 = vmatprep.mubr.bf16.mxu0 0
        %1280 = vmatmul.mubr.bf16.gmra.mrb[0].mxu0 %v1126
        %v1281 = vpop.f32.mrb[0].mxu0
        %v1282 = vadd.f32 %v1158, %v1281
        %v1283 = vpop.f32.mrb[0].mxu0
        %v1284 = vpop.f32.mrb[0].mxu0
        %v1285 = vadd.f32 %v1158, %v1284
        %v1286 = vpop.f32.mrb[0].mxu0
        %1287 = vmatprep.mubr.bf16.mxu0 0
        %1288 = vmatmul.mubr.bf16.gmra.mrb[0].mxu0 %v1127
        %v1289 = vpop.f32.mrb[0].mxu0
        %v1290 = vadd.f32 %v1158, %v1289
        %v1291 = vpop.f32.mrb[0].mxu0
        %v1292 = vpop.f32.mrb[0].mxu0
        %v1293 = vadd.f32 %v1158, %v1292
        %v1294 = vpop.f32.mrb[0].mxu0
        %1295 = vmatprep.mubr.bf16.mxu0 0
        %1296 = vmatmul.mubr.bf16.gmra.mrb[0].mxu0 %v1128
        %v1297 = vpop.f32.mrb[0].mxu0
        %v1298 = vadd.f32 %v1158, %v1297
        %v1299 = vpop.f32.mrb[0].mxu0
        %v1300 = vpop.f32.mrb[0].mxu0
        %v1301 = vadd.f32 %v1158, %v1300
        %v1302 = vpop.f32.mrb[0].mxu0
        %1303 = vmatprep.mubr.bf16.mxu0 0
        %1304 = vmatmul.mubr.bf16.gmra.mrb[0].mxu0 %v1129
        %v1305 = vpop.f32.mrb[0].mxu0
        %v1306 = vadd.f32 %v1158, %v1305
        %v1307 = vpop.f32.mrb[0].mxu0
        %v1308 = vpop.f32.mrb[0].mxu0
        %v1309 = vadd.f32 %v1158, %v1308
        %v1310 = vpop.f32.mrb[0].mxu0
        %1311 = vmatprep.mubr.bf16.mxu0 0
        %1312 = vmatmul.mubr.bf16.gmra.mrb[0].mxu0 %v1130
        %v1313 = vpop.f32.mrb[0].mxu0
        %v1314 = vadd.f32 %v1158, %v1313
        %v1315 = vpop.f32.mrb[0].mxu0
        %v1316 = vpop.f32.mrb[0].mxu0
        %v1317 = vadd.f32 %v1158, %v1316
        %v1318 = vpop.f32.mrb[0].mxu0
        %1319 = vmatprep.mubr.bf16.mxu0 0
        %1320 = vmatmul.mubr.bf16.gmra.mrb[0].mxu0 %v1131
        %v1321 = vpop.f32.mrb[0].mxu0
        %v1322 = vadd.f32 %v1158, %v1321
        %v1323 = vpop.f32.mrb[0].mxu0
        %v1324 = vpop.f32.mrb[0].mxu0
        %v1325 = vadd.f32 %v1158, %v1324
        %v1326 = vpop.f32.mrb[0].mxu0
        %1327 = vmatprep.mubr.bf16.mxu0 0
        %1328 = vmatmul.mubr.bf16.gmra.mrb[0].mxu0 %v1132
        %v1329 = vpop.f32.mrb[0].mxu0
        %v1330 = vadd.f32 %v1158, %v1329
        %v1331 = vpop.f32.mrb[0].mxu0
        %v1332 = vpop.f32.mrb[0].mxu0
        %v1333 = vadd.f32 %v1158, %v1332
        %v1334 = vpop.f32.mrb[0].mxu0
        %1335 = vmatprep.mubr.bf16.mxu0 0
        %1336 = vmatmul.mubr.bf16.gmra.mrb[0].mxu0 %v1133
        %v1337 = vpop.f32.mrb[0].mxu0
        %v1338 = vadd.f32 %v1158, %v1337
        %v1339 = vpop.f32.mrb[0].mxu0
        %v1340 = vpop.f32.mrb[0].mxu0
        %v1341 = vadd.f32 %v1158, %v1340
        %v1342 = vpop.f32.mrb[0].mxu0
        %1343 = vmatprep.mubr.bf16.mxu0 0
        %1344 = vmatmul.mubr.bf16.gmra.mrb[0].mxu0 %v1134
        %v1345 = vpop.f32.mrb[0].mxu0
        %v1346 = vadd.f32 %v1158, %v1345
        %v1347 = vpop.f32.mrb[0].mxu0
        %v1348 = vpop.f32.mrb[0].mxu0
        %v1349 = vadd.f32 %v1158, %v1348
        %v1350 = vpop.f32.mrb[0].mxu0
        %1351 = vmatprep.mubr.bf16.mxu0 0
        %1352 = vmatmul.mubr.bf16.gmra.mrb[0].mxu0 %v1135
        %v1353 = vpop.f32.mrb[0].mxu0
        %v1354 = vadd.f32 %v1158, %v1353
        %v1355 = vpop.f32.mrb[0].mxu0
        %v1356 = vpop.f32.mrb[0].mxu0
        %v1357 = vadd.f32 %v1158, %v1356
        %v1358 = vpop.f32.mrb[0].mxu0
        %1359 = vmatprep.mubr.bf16.mxu0 0
        %1360 = vmatmul.mubr.bf16.gmra.mrb[0].mxu0 %v1136
        %v1361 = vpop.f32.mrb[0].mxu0
        %v1362 = vadd.f32 %v1158, %v1361
        %v1363 = vpop.f32.mrb[0].mxu0
        %v1364 = vpop.f32.mrb[0].mxu0
        %v1365 = vadd.f32 %v1158, %v1364
        %v1366 = vpop.f32.mrb[0].mxu0
        %1367 = vdwg.mxu0
        %v1368 = vpack.c.bf16 %v1245, %v1242
        %v1369 = vpack.c.bf16 %v1253, %v1250
        %v1370 = vpack.c.bf16 %v1261, %v1258
        %v1371 = vpack.c.bf16 %v1269, %v1266
        %v1372 = vpack.c.bf16 %v1277, %v1274
        %v1373 = vpack.c.bf16 %v1285, %v1282
        %v1374 = vpack.c.bf16 %v1293, %v1290
        %v1375 = vpack.c.bf16 %v1301, %v1298
        %v1376 = vpack.c.bf16 %v1309, %v1306
        %v1377 = vpack.c.bf16 %v1317, %v1314
        %v1378 = vpack.c.bf16 %v1325, %v1322
        %v1379 = vpack.c.bf16 %v1333, %v1330
        %v1380 = vpack.c.bf16 %v1341, %v1338
        %v1381 = vpack.c.bf16 %v1349, %v1346
        %v1382 = vpack.c.bf16 %v1357, %v1354
        %v1383 = vpack.c.bf16 %v1365, %v1362
        %s1384 = scalar_lea.vmem %s1, 256
        %v1385 = vld [vmem:[%s1384] sm:$0xf]
        %v1386 = vld [vmem:[%s1384 + $0x4] sm:$0xf]
        %v1387 = vld [vmem:[%s1384 + $0x8] sm:$0xf]
        %v1388 = vld [vmem:[%s1384 + $0xc] sm:$0xf]
        %v1389 = vld [vmem:[%s1384 + $0x10] sm:$0xf]
        %v1390 = vld [vmem:[%s1384 + $0x14] sm:$0xf]
        %v1391 = vld [vmem:[%s1384 + $0x18] sm:$0xf]
        %v1392 = vld [vmem:[%s1384 + $0x1c] sm:$0xf]
        %v1393 = vld [vmem:[%s1384 + $0x20] sm:$0xf]
        %v1394 = vld [vmem:[%s1384 + $0x24] sm:$0xf]
        %v1395 = vld [vmem:[%s1384 + $0x28] sm:$0xf]
        %v1396 = vld [vmem:[%s1384 + $0x2c] sm:$0xf]
        %v1397 = vld [vmem:[%s1384 + $0x30] sm:$0xf]
        %v1398 = vld [vmem:[%s1384 + $0x34] sm:$0xf]
        %v1399 = vld [vmem:[%s1384 + $0x38] sm:$0xf]
        %v1400 = vld [vmem:[%s1384 + $0x3c] sm:$0xf]
        %v1401 = vld [vmem:[%s2 + $0x4] sm:$0x1]
        %v1402 = vlaneseq
        %v1403 = vshrl.u32 %v1402, 7
        %v1404 = vsub.s32 0, %v1403
        %v1405 = vrot.slane %v1401, %v1404
        %v1422 = vunpack.c.l.b16 %v1385
        %v1423 = vunpack.c.l.b16 %v1386
        %v1424 = vunpack.c.l.b16 %v1387
        %v1425 = vunpack.c.l.b16 %v1388
        %v1426 = vunpack.c.l.b16 %v1389
        %v1427 = vunpack.c.l.b16 %v1390
        %v1428 = vunpack.c.l.b16 %v1391
        %v1429 = vunpack.c.l.b16 %v1392
        %v1430 = vunpack.c.l.b16 %v1393
        %v1431 = vunpack.c.l.b16 %v1394
        %v1432 = vunpack.c.l.b16 %v1395
        %v1433 = vunpack.c.l.b16 %v1396
        %v1434 = vunpack.c.l.b16 %v1397
        %v1435 = vunpack.c.l.b16 %v1398
        %v1436 = vunpack.c.l.b16 %v1399
        %v1437 = vunpack.c.l.b16 %v1400
        %v1438 = vpack.c.b16 %v1423, %v1422
        %v1439 = vpack.c.b16 %v1425, %v1424
        %v1440 = vpack.c.b16 %v1427, %v1426
        %v1441 = vpack.c.b16 %v1429, %v1428
        %v1442 = vpack.c.b16 %v1431, %v1430
        %v1443 = vpack.c.b16 %v1433, %v1432
        %v1444 = vpack.c.b16 %v1435, %v1434
        %v1445 = vpack.c.b16 %v1437, %v1436
        %1454 = vmatprep.subr.bf16.mxu0 0
        %1455 = vmatpush1.bf16.msra.mxu0 %v1438
        %1456 = vmatprep.subr.bf16.mxu0 0
        %1457 = vmatpush1.bf16.msra.mxu0 %v1439
        %1458 = vmatprep.subr.bf16.mxu0 0
        %1459 = vmatpush1.bf16.msra.mxu0 %v1440
        %1460 = vmatprep.subr.bf16.mxu0 0
        %1461 = vmatpush1.bf16.msra.mxu0 %v1441
        %1462 = vmatprep.subr.bf16.mxu0 0
        %1463 = vmatpush1.bf16.msra.mxu0 %v1442
        %1464 = vmatprep.subr.bf16.mxu0 0
        %1465 = vmatpush1.bf16.msra.mxu0 %v1443
        %1466 = vmatprep.subr.bf16.mxu0 0
        %1467 = vmatpush1.bf16.msra.mxu0 %v1444
        %1468 = vmatprep.subr.bf16.mxu0 0
        %1469 = vmatpush1.bf16.msra.mxu0 %v1445
        %1470 = vmatprep.subr.bf16.mxu0 0
        %1471 = vmatpush1.bf16.msra.mxu0 0
        %1472 = vmatprep.subr.bf16.mxu0 0
        %1473 = vmatpush1.bf16.msra.mxu0 0
        %1474 = vmatprep.subr.bf16.mxu0 0
        %1475 = vmatpush1.bf16.msra.mxu0 0
        %1476 = vmatprep.subr.bf16.mxu0 0
        %1477 = vmatpush1.bf16.msra.mxu0 0
        %1478 = vmatprep.subr.bf16.mxu0 0
        %1479 = vmatpush1.bf16.msra.mxu0 0
        %1480 = vmatprep.subr.bf16.mxu0 0
        %1481 = vmatpush1.bf16.msra.mxu0 0
        %1482 = vmatprep.subr.bf16.mxu0 0
        %1483 = vmatpush1.bf16.msra.mxu0 0
        %1484 = vmatprep.subr.bf16.mxu0 0
        %1485 = vmatpush1.bf16.msra.mxu0 0
        %1486 = vmatprep.mubr.bf16.mxu0 0
        %1487 = vmatmul.mubr.bf16.gmra.mrb[0].mxu0 %v1368
        %v1488 = vpop.f32.mrb[0].mxu0
        %v1489 = vadd.f32 %v1405, %v1488
        %v1490 = vpop.f32.mrb[0].mxu0
        %v1491 = vpop.f32.mrb[0].mxu0
        %v1492 = vadd.f32 %v1405, %v1491
        %v1493 = vpop.f32.mrb[0].mxu0
        %1494 = vmatprep.mubr.bf16.mxu0 0
        %1495 = vmatmul.mubr.bf16.gmra.mrb[0].mxu0 %v1369
        %v1496 = vpop.f32.mrb[0].mxu0
        %v1497 = vadd.f32 %v1405, %v1496
        %v1498 = vpop.f32.mrb[0].mxu0
        %v1499 = vpop.f32.mrb[0].mxu0
        %v1500 = vadd.f32 %v1405, %v1499
        %v1501 = vpop.f32.mrb[0].mxu0
        %1502 = vmatprep.mubr.bf16.mxu0 0
        %1503 = vmatmul.mubr.bf16.gmra.mrb[0].mxu0 %v1370
        %v1504 = vpop.f32.mrb[0].mxu0
        %v1505 = vadd.f32 %v1405, %v1504
        %v1506 = vpop.f32.mrb[0].mxu0
        %v1507 = vpop.f32.mrb[0].mxu0
        %v1508 = vadd.f32 %v1405, %v1507
        %v1509 = vpop.f32.mrb[0].mxu0
        %1510 = vmatprep.mubr.bf16.mxu0 0
        %1511 = vmatmul.mubr.bf16.gmra.mrb[0].mxu0 %v1371
        %v1512 = vpop.f32.mrb[0].mxu0
        %v1513 = vadd.f32 %v1405, %v1512
        %v1514 = vpop.f32.mrb[0].mxu0
        %v1515 = vpop.f32.mrb[0].mxu0
        %v1516 = vadd.f32 %v1405, %v1515
        %v1517 = vpop.f32.mrb[0].mxu0
        %1518 = vmatprep.mubr.bf16.mxu0 0
        %1519 = vmatmul.mubr.bf16.gmra.mrb[0].mxu0 %v1372
        %v1520 = vpop.f32.mrb[0].mxu0
        %v1521 = vadd.f32 %v1405, %v1520
        %v1522 = vpop.f32.mrb[0].mxu0
        %v1523 = vpop.f32.mrb[0].mxu0
        %v1524 = vadd.f32 %v1405, %v1523
        %v1525 = vpop.f32.mrb[0].mxu0
        %1526 = vmatprep.mubr.bf16.mxu0 0
        %1527 = vmatmul.mubr.bf16.gmra.mrb[0].mxu0 %v1373
        %v1528 = vpop.f32.mrb[0].mxu0
        %v1529 = vadd.f32 %v1405, %v1528
        %v1530 = vpop.f32.mrb[0].mxu0
        %v1531 = vpop.f32.mrb[0].mxu0
        %v1532 = vadd.f32 %v1405, %v1531
        %v1533 = vpop.f32.mrb[0].mxu0
        %1534 = vmatprep.mubr.bf16.mxu0 0
        %1535 = vmatmul.mubr.bf16.gmra.mrb[0].mxu0 %v1374
        %v1536 = vpop.f32.mrb[0].mxu0
        %v1537 = vadd.f32 %v1405, %v1536
        %v1538 = vpop.f32.mrb[0].mxu0
        %v1539 = vpop.f32.mrb[0].mxu0
        %v1540 = vadd.f32 %v1405, %v1539
        %v1541 = vpop.f32.mrb[0].mxu0
        %1542 = vmatprep.mubr.bf16.mxu0 0
        %1543 = vmatmul.mubr.bf16.gmra.mrb[0].mxu0 %v1375
        %v1544 = vpop.f32.mrb[0].mxu0
        %v1545 = vadd.f32 %v1405, %v1544
        %v1546 = vpop.f32.mrb[0].mxu0
        %v1547 = vpop.f32.mrb[0].mxu0
        %v1548 = vadd.f32 %v1405, %v1547
        %v1549 = vpop.f32.mrb[0].mxu0
        %1550 = vmatprep.mubr.bf16.mxu0 0
        %1551 = vmatmul.mubr.bf16.gmra.mrb[0].mxu0 %v1376
        %v1552 = vpop.f32.mrb[0].mxu0
        %v1553 = vadd.f32 %v1405, %v1552
        %v1554 = vpop.f32.mrb[0].mxu0
        %v1555 = vpop.f32.mrb[0].mxu0
        %v1556 = vadd.f32 %v1405, %v1555
        %v1557 = vpop.f32.mrb[0].mxu0
        %1558 = vmatprep.mubr.bf16.mxu0 0
        %1559 = vmatmul.mubr.bf16.gmra.mrb[0].mxu0 %v1377
        %v1560 = vpop.f32.mrb[0].mxu0
        %v1561 = vadd.f32 %v1405, %v1560
        %v1562 = vpop.f32.mrb[0].mxu0
        %v1563 = vpop.f32.mrb[0].mxu0
        %v1564 = vadd.f32 %v1405, %v1563
        %v1565 = vpop.f32.mrb[0].mxu0
        %1566 = vmatprep.mubr.bf16.mxu0 0
        %1567 = vmatmul.mubr.bf16.gmra.mrb[0].mxu0 %v1378
        %v1568 = vpop.f32.mrb[0].mxu0
        %v1569 = vadd.f32 %v1405, %v1568
        %v1570 = vpop.f32.mrb[0].mxu0
        %v1571 = vpop.f32.mrb[0].mxu0
        %v1572 = vadd.f32 %v1405, %v1571
        %v1573 = vpop.f32.mrb[0].mxu0
        %1574 = vmatprep.mubr.bf16.mxu0 0
        %1575 = vmatmul.mubr.bf16.gmra.mrb[0].mxu0 %v1379
        %v1576 = vpop.f32.mrb[0].mxu0
        %v1577 = vadd.f32 %v1405, %v1576
        %v1578 = vpop.f32.mrb[0].mxu0
        %v1579 = vpop.f32.mrb[0].mxu0
        %v1580 = vadd.f32 %v1405, %v1579
        %v1581 = vpop.f32.mrb[0].mxu0
        %1582 = vmatprep.mubr.bf16.mxu0 0
        %1583 = vmatmul.mubr.bf16.gmra.mrb[0].mxu0 %v1380
        %v1584 = vpop.f32.mrb[0].mxu0
        %v1585 = vadd.f32 %v1405, %v1584
        %v1586 = vpop.f32.mrb[0].mxu0
        %v1587 = vpop.f32.mrb[0].mxu0
        %v1588 = vadd.f32 %v1405, %v1587
        %v1589 = vpop.f32.mrb[0].mxu0
        %1590 = vmatprep.mubr.bf16.mxu0 0
        %1591 = vmatmul.mubr.bf16.gmra.mrb[0].mxu0 %v1381
        %v1592 = vpop.f32.mrb[0].mxu0
        %v1593 = vadd.f32 %v1405, %v1592
        %v1594 = vpop.f32.mrb[0].mxu0
        %v1595 = vpop.f32.mrb[0].mxu0
        %v1596 = vadd.f32 %v1405, %v1595
        %v1597 = vpop.f32.mrb[0].mxu0
        %1598 = vmatprep.mubr.bf16.mxu0 0
        %1599 = vmatmul.mubr.bf16.gmra.mrb[0].mxu0 %v1382
        %v1600 = vpop.f32.mrb[0].mxu0
        %v1601 = vadd.f32 %v1405, %v1600
        %v1602 = vpop.f32.mrb[0].mxu0
        %v1603 = vpop.f32.mrb[0].mxu0
        %v1604 = vadd.f32 %v1405, %v1603
        %v1605 = vpop.f32.mrb[0].mxu0
        %1606 = vmatprep.mubr.bf16.mxu0 0
        %1607 = vmatmul.mubr.bf16.gmra.mrb[0].mxu0 %v1383
        %v1608 = vpop.f32.mrb[0].mxu0
        %v1609 = vadd.f32 %v1405, %v1608
        %v1610 = vpop.f32.mrb[0].mxu0
        %v1611 = vpop.f32.mrb[0].mxu0
        %v1612 = vadd.f32 %v1405, %v1611
        %v1613 = vpop.f32.mrb[0].mxu0
        %1614 = vdwg.mxu0
        %v1615 = vtanh.pop %v1489
        %v1616 = vtanh.pop %v1492
        %v1617 = vtanh.pop %v1497
        %v1618 = vtanh.pop %v1500
        %v1619 = vtanh.pop %v1505
        %v1620 = vtanh.pop %v1508
        %v1621 = vtanh.pop %v1513
        %v1622 = vtanh.pop %v1516
        %v1623 = vtanh.pop %v1521
        %v1624 = vtanh.pop %v1524
        %v1625 = vtanh.pop %v1529
        %v1626 = vtanh.pop %v1532
        %v1627 = vtanh.pop %v1537
        %v1628 = vtanh.pop %v1540
        %v1629 = vtanh.pop %v1545
        %v1630 = vtanh.pop %v1548
        %v1631 = vtanh.pop %v1553
        %v1632 = vtanh.pop %v1556
        %v1633 = vtanh.pop %v1561
        %v1634 = vtanh.pop %v1564
        %v1635 = vtanh.pop %v1569
        %v1636 = vtanh.pop %v1572
        %v1637 = vtanh.pop %v1577
        %v1638 = vtanh.pop %v1580
        %v1639 = vtanh.pop %v1585
        %v1640 = vtanh.pop %v1588
        %v1641 = vtanh.pop %v1593
        %v1642 = vtanh.pop %v1596
        %v1643 = vtanh.pop %v1601
        %v1644 = vtanh.pop %v1604
        %v1645 = vtanh.pop %v1609
        %v1646 = vtanh.pop %v1612
        %v1647 = vpack.c.bf16 %v1616, %v1615
        %v1648 = vpack.c.bf16 %v1618, %v1617
        %v1649 = vpack.c.bf16 %v1620, %v1619
        %v1650 = vpack.c.bf16 %v1622, %v1621
        %v1651 = vpack.c.bf16 %v1624, %v1623
        %v1652 = vpack.c.bf16 %v1626, %v1625
        %v1653 = vpack.c.bf16 %v1628, %v1627
        %v1654 = vpack.c.bf16 %v1630, %v1629
        %v1655 = vpack.c.bf16 %v1632, %v1631
        %v1656 = vpack.c.bf16 %v1634, %v1633
        %v1657 = vpack.c.bf16 %v1636, %v1635
        %v1658 = vpack.c.bf16 %v1638, %v1637
        %v1659 = vpack.c.bf16 %v1640, %v1639
        %v1660 = vpack.c.bf16 %v1642, %v1641
        %v1661 = vpack.c.bf16 %v1644, %v1643
        %v1662 = vpack.c.bf16 %v1646, %v1645
        %s1663 = scalar_lea.vmem %s1, 320
        %v1664 = vld [vmem:[%s1663] sm:$0xf]
        %v1665 = vld [vmem:[%s1663 + $0x4] sm:$0xf]
        %v1666 = vld [vmem:[%s1663 + $0x8] sm:$0xf]
        %v1667 = vld [vmem:[%s1663 + $0xc] sm:$0xf]
        %v1668 = vld [vmem:[%s1663 + $0x10] sm:$0xf]
        %v1669 = vld [vmem:[%s1663 + $0x14] sm:$0xf]
        %v1670 = vld [vmem:[%s1663 + $0x18] sm:$0xf]
        %v1671 = vld [vmem:[%s1663 + $0x1c] sm:$0xf]
        %v1672 = vld [vmem:[%s1663 + $0x20] sm:$0xf]
        %v1673 = vld [vmem:[%s1663 + $0x24] sm:$0xf]
        %v1674 = vld [vmem:[%s1663 + $0x28] sm:$0xf]
        %v1675 = vld [vmem:[%s1663 + $0x2c] sm:$0xf]
        %v1676 = vld [vmem:[%s1663 + $0x30] sm:$0xf]
        %v1677 = vld [vmem:[%s1663 + $0x34] sm:$0xf]
        %v1678 = vld [vmem:[%s1663 + $0x38] sm:$0xf]
        %v1679 = vld [vmem:[%s1663 + $0x3c] sm:$0xf]
        %v1680 = vld [vmem:[%s2 + $0x5] sm:$0x1]
        %v1681 = vlaneseq
        %v1682 = vshrl.u32 %v1681, 7
        %v1683 = vsub.s32 0, %v1682
        %v1684 = vrot.slane %v1680, %v1683
        %v1701 = vunpack.c.l.b16 %v1664
        %v1702 = vunpack.c.l.b16 %v1665
        %v1703 = vunpack.c.l.b16 %v1666
        %v1704 = vunpack.c.l.b16 %v1667
        %v1705 = vunpack.c.l.b16 %v1668
        %v1706 = vunpack.c.l.b16 %v1669
        %v1707 = vunpack.c.l.b16 %v1670
        %v1708 = vunpack.c.l.b16 %v1671
        %v1709 = vunpack.c.l.b16 %v1672
        %v1710 = vunpack.c.l.b16 %v1673
        %v1711 = vunpack.c.l.b16 %v1674
        %v1712 = vunpack.c.l.b16 %v1675
        %v1713 = vunpack.c.l.b16 %v1676
        %v1714 = vunpack.c.l.b16 %v1677
        %v1715 = vunpack.c.l.b16 %v1678
        %v1716 = vunpack.c.l.b16 %v1679
        %v1717 = vpack.c.b16 %v1702, %v1701
        %v1718 = vpack.c.b16 %v1704, %v1703
        %v1719 = vpack.c.b16 %v1706, %v1705
        %v1720 = vpack.c.b16 %v1708, %v1707
        %v1721 = vpack.c.b16 %v1710, %v1709
        %v1722 = vpack.c.b16 %v1712, %v1711
        %v1723 = vpack.c.b16 %v1714, %v1713
        %v1724 = vpack.c.b16 %v1716, %v1715
        %1733 = vmatprep.subr.bf16.mxu0 0
        %1734 = vmatpush1.bf16.msra.mxu0 %v1717
        %1735 = vmatprep.subr.bf16.mxu0 0
        %1736 = vmatpush1.bf16.msra.mxu0 %v1718
        %1737 = vmatprep.subr.bf16.mxu0 0
        %1738 = vmatpush1.bf16.msra.mxu0 %v1719
        %1739 = vmatprep.subr.bf16.mxu0 0
        %1740 = vmatpush1.bf16.msra.mxu0 %v1720
        %1741 = vmatprep.subr.bf16.mxu0 0
        %1742 = vmatpush1.bf16.msra.mxu0 %v1721
        %1743 = vmatprep.subr.bf16.mxu0 0
        %1744 = vmatpush1.bf16.msra.mxu0 %v1722
        %1745 = vmatprep.subr.bf16.mxu0 0
        %1746 = vmatpush1.bf16.msra.mxu0 %v1723
        %1747 = vmatprep.subr.bf16.mxu0 0
        %1748 = vmatpush1.bf16.msra.mxu0 %v1724
        %1749 = vmatprep.subr.bf16.mxu0 0
        %1750 = vmatpush1.bf16.msra.mxu0 0
        %1751 = vmatprep.subr.bf16.mxu0 0
        %1752 = vmatpush1.bf16.msra.mxu0 0
        %1753 = vmatprep.subr.bf16.mxu0 0
        %1754 = vmatpush1.bf16.msra.mxu0 0
        %1755 = vmatprep.subr.bf16.mxu0 0
        %1756 = vmatpush1.bf16.msra.mxu0 0
        %1757 = vmatprep.subr.bf16.mxu0 0
        %1758 = vmatpush1.bf16.msra.mxu0 0
        %1759 = vmatprep.subr.bf16.mxu0 0
        %1760 = vmatpush1.bf16.msra.mxu0 0
        %1761 = vmatprep.subr.bf16.mxu0 0
        %1762 = vmatpush1.bf16.msra.mxu0 0
        %1763 = vmatprep.subr.bf16.mxu0 0
        %1764 = vmatpush1.bf16.msra.mxu0 0
        %1765 = vmatprep.mubr.bf16.mxu0 0
        %1766 = vmatmul.mubr.bf16.gmra.mrb[0].mxu0 %v1647
        %v1767 = vpop.f32.mrb[0].mxu0
        %v1768 = vadd.f32 %v1684, %v1767
        %v1769 = vpop.f32.mrb[0].mxu0
        %v1770 = vpop.f32.mrb[0].mxu0
        %v1771 = vadd.f32 %v1684, %v1770
        %v1772 = vpop.f32.mrb[0].mxu0
        %1773 = vmatprep.mubr.bf16.mxu0 0
        %1774 = vmatmul.mubr.bf16.gmra.mrb[0].mxu0 %v1648
        %v1775 = vpop.f32.mrb[0].mxu0
        %v1776 = vadd.f32 %v1684, %v1775
        %v1777 = vpop.f32.mrb[0].mxu0
        %v1778 = vpop.f32.mrb[0].mxu0
        %v1779 = vadd.f32 %v1684, %v1778
        %v1780 = vpop.f32.mrb[0].mxu0
        %1781 = vmatprep.mubr.bf16.mxu0 0
        %1782 = vmatmul.mubr.bf16.gmra.mrb[0].mxu0 %v1649
        %v1783 = vpop.f32.mrb[0].mxu0
        %v1784 = vadd.f32 %v1684, %v1783
        %v1785 = vpop.f32.mrb[0].mxu0
        %v1786 = vpop.f32.mrb[0].mxu0
        %v1787 = vadd.f32 %v1684, %v1786
        %v1788 = vpop.f32.mrb[0].mxu0
        %1789 = vmatprep.mubr.bf16.mxu0 0
        %1790 = vmatmul.mubr.bf16.gmra.mrb[0].mxu0 %v1650
        %v1791 = vpop.f32.mrb[0].mxu0
        %v1792 = vadd.f32 %v1684, %v1791
        %v1793 = vpop.f32.mrb[0].mxu0
        %v1794 = vpop.f32.mrb[0].mxu0
        %v1795 = vadd.f32 %v1684, %v1794
        %v1796 = vpop.f32.mrb[0].mxu0
        %1797 = vmatprep.mubr.bf16.mxu0 0
        %1798 = vmatmul.mubr.bf16.gmra.mrb[0].mxu0 %v1651
        %v1799 = vpop.f32.mrb[0].mxu0
        %v1800 = vadd.f32 %v1684, %v1799
        %v1801 = vpop.f32.mrb[0].mxu0
        %v1802 = vpop.f32.mrb[0].mxu0
        %v1803 = vadd.f32 %v1684, %v1802
        %v1804 = vpop.f32.mrb[0].mxu0
        %1805 = vmatprep.mubr.bf16.mxu0 0
        %1806 = vmatmul.mubr.bf16.gmra.mrb[0].mxu0 %v1652
        %v1807 = vpop.f32.mrb[0].mxu0
        %v1808 = vadd.f32 %v1684, %v1807
        %v1809 = vpop.f32.mrb[0].mxu0
        %v1810 = vpop.f32.mrb[0].mxu0
        %v1811 = vadd.f32 %v1684, %v1810
        %v1812 = vpop.f32.mrb[0].mxu0
        %1813 = vmatprep.mubr.bf16.mxu0 0
        %1814 = vmatmul.mubr.bf16.gmra.mrb[0].mxu0 %v1653
        %v1815 = vpop.f32.mrb[0].mxu0
        %v1816 = vadd.f32 %v1684, %v1815
        %v1817 = vpop.f32.mrb[0].mxu0
        %v1818 = vpop.f32.mrb[0].mxu0
        %v1819 = vadd.f32 %v1684, %v1818
        %v1820 = vpop.f32.mrb[0].mxu0
        %1821 = vmatprep.mubr.bf16.mxu0 0
        %1822 = vmatmul.mubr.bf16.gmra.mrb[0].mxu0 %v1654
        %v1823 = vpop.f32.mrb[0].mxu0
        %v1824 = vadd.f32 %v1684, %v1823
        %v1825 = vpop.f32.mrb[0].mxu0
        %v1826 = vpop.f32.mrb[0].mxu0
        %v1827 = vadd.f32 %v1684, %v1826
        %v1828 = vpop.f32.mrb[0].mxu0
        %1829 = vmatprep.mubr.bf16.mxu0 0
        %1830 = vmatmul.mubr.bf16.gmra.mrb[0].mxu0 %v1655
        %v1831 = vpop.f32.mrb[0].mxu0
        %v1832 = vadd.f32 %v1684, %v1831
        %v1833 = vpop.f32.mrb[0].mxu0
        %v1834 = vpop.f32.mrb[0].mxu0
        %v1835 = vadd.f32 %v1684, %v1834
        %v1836 = vpop.f32.mrb[0].mxu0
        %1837 = vmatprep.mubr.bf16.mxu0 0
        %1838 = vmatmul.mubr.bf16.gmra.mrb[0].mxu0 %v1656
        %v1839 = vpop.f32.mrb[0].mxu0
        %v1840 = vadd.f32 %v1684, %v1839
        %v1841 = vpop.f32.mrb[0].mxu0
        %v1842 = vpop.f32.mrb[0].mxu0
        %v1843 = vadd.f32 %v1684, %v1842
        %v1844 = vpop.f32.mrb[0].mxu0
        %1845 = vmatprep.mubr.bf16.mxu0 0
        %1846 = vmatmul.mubr.bf16.gmra.mrb[0].mxu0 %v1657
        %v1847 = vpop.f32.mrb[0].mxu0
        %v1848 = vadd.f32 %v1684, %v1847
        %v1849 = vpop.f32.mrb[0].mxu0
        %v1850 = vpop.f32.mrb[0].mxu0
        %v1851 = vadd.f32 %v1684, %v1850
        %v1852 = vpop.f32.mrb[0].mxu0
        %1853 = vmatprep.mubr.bf16.mxu0 0
        %1854 = vmatmul.mubr.bf16.gmra.mrb[0].mxu0 %v1658
        %v1855 = vpop.f32.mrb[0].mxu0
        %v1856 = vadd.f32 %v1684, %v1855
        %v1857 = vpop.f32.mrb[0].mxu0
        %v1858 = vpop.f32.mrb[0].mxu0
        %v1859 = vadd.f32 %v1684, %v1858
        %v1860 = vpop.f32.mrb[0].mxu0
        %1861 = vmatprep.mubr.bf16.mxu0 0
        %1862 = vmatmul.mubr.bf16.gmra.mrb[0].mxu0 %v1659
        %v1863 = vpop.f32.mrb[0].mxu0
        %v1864 = vadd.f32 %v1684, %v1863
        %v1865 = vpop.f32.mrb[0].mxu0
        %v1866 = vpop.f32.mrb[0].mxu0
        %v1867 = vadd.f32 %v1684, %v1866
        %v1868 = vpop.f32.mrb[0].mxu0
        %1869 = vmatprep.mubr.bf16.mxu0 0
        %1870 = vmatmul.mubr.bf16.gmra.mrb[0].mxu0 %v1660
        %v1871 = vpop.f32.mrb[0].mxu0
        %v1872 = vadd.f32 %v1684, %v1871
        %v1873 = vpop.f32.mrb[0].mxu0
        %v1874 = vpop.f32.mrb[0].mxu0
        %v1875 = vadd.f32 %v1684, %v1874
        %v1876 = vpop.f32.mrb[0].mxu0
        %1877 = vmatprep.mubr.bf16.mxu0 0
        %1878 = vmatmul.mubr.bf16.gmra.mrb[0].mxu0 %v1661
        %v1879 = vpop.f32.mrb[0].mxu0
        %v1880 = vadd.f32 %v1684, %v1879
        %v1881 = vpop.f32.mrb[0].mxu0
        %v1882 = vpop.f32.mrb[0].mxu0
        %v1883 = vadd.f32 %v1684, %v1882
        %v1884 = vpop.f32.mrb[0].mxu0
        %1885 = vmatprep.mubr.bf16.mxu0 0
        %1886 = vmatmul.mubr.bf16.gmra.mrb[0].mxu0 %v1662
        %v1887 = vpop.f32.mrb[0].mxu0
        %v1888 = vadd.f32 %v1684, %v1887
        %v1889 = vpop.f32.mrb[0].mxu0
        %v1890 = vpop.f32.mrb[0].mxu0
        %v1891 = vadd.f32 %v1684, %v1890
        %v1892 = vpop.f32.mrb[0].mxu0
        %1893 = vdwg.mxu0
        %v1894 = vtanh.pop %v1768
        %v1895 = vtanh.pop %v1771
        %v1896 = vtanh.pop %v1776
        %v1897 = vtanh.pop %v1779
        %v1898 = vtanh.pop %v1784
        %v1899 = vtanh.pop %v1787
        %v1900 = vtanh.pop %v1792
        %v1901 = vtanh.pop %v1795
        %v1902 = vtanh.pop %v1800
        %v1903 = vtanh.pop %v1803
        %v1904 = vtanh.pop %v1808
        %v1905 = vtanh.pop %v1811
        %v1906 = vtanh.pop %v1816
        %v1907 = vtanh.pop %v1819
        %v1908 = vtanh.pop %v1824
        %v1909 = vtanh.pop %v1827
        %v1910 = vtanh.pop %v1832
        %v1911 = vtanh.pop %v1835
        %v1912 = vtanh.pop %v1840
        %v1913 = vtanh.pop %v1843
        %v1914 = vtanh.pop %v1848
        %v1915 = vtanh.pop %v1851
        %v1916 = vtanh.pop %v1856
        %v1917 = vtanh.pop %v1859
        %v1918 = vtanh.pop %v1864
        %v1919 = vtanh.pop %v1867
        %v1920 = vtanh.pop %v1872
        %v1921 = vtanh.pop %v1875
        %v1922 = vtanh.pop %v1880
        %v1923 = vtanh.pop %v1883
        %v1924 = vtanh.pop %v1888
        %v1925 = vtanh.pop %v1891
        %v1926 = vpack.c.bf16 %v1895, %v1894
        %v1927 = vpack.c.bf16 %v1897, %v1896
        %v1928 = vpack.c.bf16 %v1899, %v1898
        %v1929 = vpack.c.bf16 %v1901, %v1900
        %v1930 = vpack.c.bf16 %v1903, %v1902
        %v1931 = vpack.c.bf16 %v1905, %v1904
        %v1932 = vpack.c.bf16 %v1907, %v1906
        %v1933 = vpack.c.bf16 %v1909, %v1908
        %v1934 = vpack.c.bf16 %v1911, %v1910
        %v1935 = vpack.c.bf16 %v1913, %v1912
        %v1936 = vpack.c.bf16 %v1915, %v1914
        %v1937 = vpack.c.bf16 %v1917, %v1916
        %v1938 = vpack.c.bf16 %v1919, %v1918
        %v1939 = vpack.c.bf16 %v1921, %v1920
        %v1940 = vpack.c.bf16 %v1923, %v1922
        %v1941 = vpack.c.bf16 %v1925, %v1924
        %s1942 = scalar_lea.vmem %s1, 384
        %v1943 = vld [vmem:[%s1942] sm:$0xf]
        %v1944 = vld [vmem:[%s1942 + $0x4] sm:$0xf]
        %v1945 = vld [vmem:[%s1942 + $0x8] sm:$0xf]
        %v1946 = vld [vmem:[%s1942 + $0xc] sm:$0xf]
        %v1947 = vld [vmem:[%s1942 + $0x10] sm:$0xf]
        %v1948 = vld [vmem:[%s1942 + $0x14] sm:$0xf]
        %v1949 = vld [vmem:[%s1942 + $0x18] sm:$0xf]
        %v1950 = vld [vmem:[%s1942 + $0x1c] sm:$0xf]
        %v1951 = vld [vmem:[%s1942 + $0x20] sm:$0xf]
        %v1952 = vld [vmem:[%s1942 + $0x24] sm:$0xf]
        %v1953 = vld [vmem:[%s1942 + $0x28] sm:$0xf]
        %v1954 = vld [vmem:[%s1942 + $0x2c] sm:$0xf]
        %v1955 = vld [vmem:[%s1942 + $0x30] sm:$0xf]
        %v1956 = vld [vmem:[%s1942 + $0x34] sm:$0xf]
        %v1957 = vld [vmem:[%s1942 + $0x38] sm:$0xf]
        %v1958 = vld [vmem:[%s1942 + $0x3c] sm:$0xf]
        %v1959 = vld [vmem:[%s2 + $0x6] sm:$0x1]
        %v1960 = vlaneseq
        %v1961 = vshrl.u32 %v1960, 7
        %v1962 = vsub.s32 0, %v1961
        %v1963 = vrot.slane %v1959, %v1962
        %v1980 = vunpack.c.l.b16 %v1943
        %v1981 = vunpack.c.l.b16 %v1944
        %v1982 = vunpack.c.l.b16 %v1945
        %v1983 = vunpack.c.l.b16 %v1946
        %v1984 = vunpack.c.l.b16 %v1947
        %v1985 = vunpack.c.l.b16 %v1948
        %v1986 = vunpack.c.l.b16 %v1949
        %v1987 = vunpack.c.l.b16 %v1950
        %v1988 = vunpack.c.l.b16 %v1951
        %v1989 = vunpack.c.l.b16 %v1952
        %v1990 = vunpack.c.l.b16 %v1953
        %v1991 = vunpack.c.l.b16 %v1954
        %v1992 = vunpack.c.l.b16 %v1955
        %v1993 = vunpack.c.l.b16 %v1956
        %v1994 = vunpack.c.l.b16 %v1957
        %v1995 = vunpack.c.l.b16 %v1958
        %v1996 = vpack.c.b16 %v1981, %v1980
        %v1997 = vpack.c.b16 %v1983, %v1982
        %v1998 = vpack.c.b16 %v1985, %v1984
        %v1999 = vpack.c.b16 %v1987, %v1986
        %v2000 = vpack.c.b16 %v1989, %v1988
        %v2001 = vpack.c.b16 %v1991, %v1990
        %v2002 = vpack.c.b16 %v1993, %v1992
        %v2003 = vpack.c.b16 %v1995, %v1994
        %2012 = vmatprep.subr.bf16.mxu0 0
        %2013 = vmatpush1.bf16.msra.mxu0 %v1996
        %2014 = vmatprep.subr.bf16.mxu0 0
        %2015 = vmatpush1.bf16.msra.mxu0 %v1997
        %2016 = vmatprep.subr.bf16.mxu0 0
        %2017 = vmatpush1.bf16.msra.mxu0 %v1998
        %2018 = vmatprep.subr.bf16.mxu0 0
        %2019 = vmatpush1.bf16.msra.mxu0 %v1999
        %2020 = vmatprep.subr.bf16.mxu0 0
        %2021 = vmatpush1.bf16.msra.mxu0 %v2000
        %2022 = vmatprep.subr.bf16.mxu0 0
        %2023 = vmatpush1.bf16.msra.mxu0 %v2001
        %2024 = vmatprep.subr.bf16.mxu0 0
        %2025 = vmatpush1.bf16.msra.mxu0 %v2002
        %2026 = vmatprep.subr.bf16.mxu0 0
        %2027 = vmatpush1.bf16.msra.mxu0 %v2003
        %2028 = vmatprep.subr.bf16.mxu0 0
        %2029 = vmatpush1.bf16.msra.mxu0 0
        %2030 = vmatprep.subr.bf16.mxu0 0
        %2031 = vmatpush1.bf16.msra.mxu0 0
        %2032 = vmatprep.subr.bf16.mxu0 0
        %2033 = vmatpush1.bf16.msra.mxu0 0
        %2034 = vmatprep.subr.bf16.mxu0 0
        %2035 = vmatpush1.bf16.msra.mxu0 0
        %2036 = vmatprep.subr.bf16.mxu0 0
        %2037 = vmatpush1.bf16.msra.mxu0 0
        %2038 = vmatprep.subr.bf16.mxu0 0
        %2039 = vmatpush1.bf16.msra.mxu0 0
        %2040 = vmatprep.subr.bf16.mxu0 0
        %2041 = vmatpush1.bf16.msra.mxu0 0
        %2042 = vmatprep.subr.bf16.mxu0 0
        %2043 = vmatpush1.bf16.msra.mxu0 0
        %2044 = vmatprep.mubr.bf16.mxu0 0
        %2045 = vmatmul.mubr.bf16.gmra.mrb[0].mxu0 %v1926
        %v2046 = vpop.f32.mrb[0].mxu0
        %v2047 = vadd.f32 %v1963, %v2046
        %v2048 = vpop.f32.mrb[0].mxu0
        %v2049 = vpop.f32.mrb[0].mxu0
        %v2050 = vadd.f32 %v1963, %v2049
        %v2051 = vpop.f32.mrb[0].mxu0
        %2052 = vmatprep.mubr.bf16.mxu0 0
        %2053 = vmatmul.mubr.bf16.gmra.mrb[0].mxu0 %v1927
        %v2054 = vpop.f32.mrb[0].mxu0
        %v2055 = vadd.f32 %v1963, %v2054
        %v2056 = vpop.f32.mrb[0].mxu0
        %v2057 = vpop.f32.mrb[0].mxu0
        %v2058 = vadd.f32 %v1963, %v2057
        %v2059 = vpop.f32.mrb[0].mxu0
        %2060 = vmatprep.mubr.bf16.mxu0 0
        %2061 = vmatmul.mubr.bf16.gmra.mrb[0].mxu0 %v1928
        %v2062 = vpop.f32.mrb[0].mxu0
        %v2063 = vadd.f32 %v1963, %v2062
        %v2064 = vpop.f32.mrb[0].mxu0
        %v2065 = vpop.f32.mrb[0].mxu0
        %v2066 = vadd.f32 %v1963, %v2065
        %v2067 = vpop.f32.mrb[0].mxu0
        %2068 = vmatprep.mubr.bf16.mxu0 0
        %2069 = vmatmul.mubr.bf16.gmra.mrb[0].mxu0 %v1929
        %v2070 = vpop.f32.mrb[0].mxu0
        %v2071 = vadd.f32 %v1963, %v2070
        %v2072 = vpop.f32.mrb[0].mxu0
        %v2073 = vpop.f32.mrb[0].mxu0
        %v2074 = vadd.f32 %v1963, %v2073
        %v2075 = vpop.f32.mrb[0].mxu0
        %2076 = vmatprep.mubr.bf16.mxu0 0
        %2077 = vmatmul.mubr.bf16.gmra.mrb[0].mxu0 %v1930
        %v2078 = vpop.f32.mrb[0].mxu0
        %v2079 = vadd.f32 %v1963, %v2078
        %v2080 = vpop.f32.mrb[0].mxu0
        %v2081 = vpop.f32.mrb[0].mxu0
        %v2082 = vadd.f32 %v1963, %v2081
        %v2083 = vpop.f32.mrb[0].mxu0
        %2084 = vmatprep.mubr.bf16.mxu0 0
        %2085 = vmatmul.mubr.bf16.gmra.mrb[0].mxu0 %v1931
        %v2086 = vpop.f32.mrb[0].mxu0
        %v2087 = vadd.f32 %v1963, %v2086
        %v2088 = vpop.f32.mrb[0].mxu0
        %v2089 = vpop.f32.mrb[0].mxu0
        %v2090 = vadd.f32 %v1963, %v2089
        %v2091 = vpop.f32.mrb[0].mxu0
        %2092 = vmatprep.mubr.bf16.mxu0 0
        %2093 = vmatmul.mubr.bf16.gmra.mrb[0].mxu0 %v1932
        %v2094 = vpop.f32.mrb[0].mxu0
        %v2095 = vadd.f32 %v1963, %v2094
        %v2096 = vpop.f32.mrb[0].mxu0
        %v2097 = vpop.f32.mrb[0].mxu0
        %v2098 = vadd.f32 %v1963, %v2097
        %v2099 = vpop.f32.mrb[0].mxu0
        %2100 = vmatprep.mubr.bf16.mxu0 0
        %2101 = vmatmul.mubr.bf16.gmra.mrb[0].mxu0 %v1933
        %v2102 = vpop.f32.mrb[0].mxu0
        %v2103 = vadd.f32 %v1963, %v2102
        %v2104 = vpop.f32.mrb[0].mxu0
        %v2105 = vpop.f32.mrb[0].mxu0
        %v2106 = vadd.f32 %v1963, %v2105
        %v2107 = vpop.f32.mrb[0].mxu0
        %2108 = vmatprep.mubr.bf16.mxu0 0
        %2109 = vmatmul.mubr.bf16.gmra.mrb[0].mxu0 %v1934
        %v2110 = vpop.f32.mrb[0].mxu0
        %v2111 = vadd.f32 %v1963, %v2110
        %v2112 = vpop.f32.mrb[0].mxu0
        %v2113 = vpop.f32.mrb[0].mxu0
        %v2114 = vadd.f32 %v1963, %v2113
        %v2115 = vpop.f32.mrb[0].mxu0
        %2116 = vmatprep.mubr.bf16.mxu0 0
        %2117 = vmatmul.mubr.bf16.gmra.mrb[0].mxu0 %v1935
        %v2118 = vpop.f32.mrb[0].mxu0
        %v2119 = vadd.f32 %v1963, %v2118
        %v2120 = vpop.f32.mrb[0].mxu0
        %v2121 = vpop.f32.mrb[0].mxu0
        %v2122 = vadd.f32 %v1963, %v2121
        %v2123 = vpop.f32.mrb[0].mxu0
        %2124 = vmatprep.mubr.bf16.mxu0 0
        %2125 = vmatmul.mubr.bf16.gmra.mrb[0].mxu0 %v1936
        %v2126 = vpop.f32.mrb[0].mxu0
        %v2127 = vadd.f32 %v1963, %v2126
        %v2128 = vpop.f32.mrb[0].mxu0
        %v2129 = vpop.f32.mrb[0].mxu0
        %v2130 = vadd.f32 %v1963, %v2129
        %v2131 = vpop.f32.mrb[0].mxu0
        %2132 = vmatprep.mubr.bf16.mxu0 0
        %2133 = vmatmul.mubr.bf16.gmra.mrb[0].mxu0 %v1937
        %v2134 = vpop.f32.mrb[0].mxu0
        %v2135 = vadd.f32 %v1963, %v2134
        %v2136 = vpop.f32.mrb[0].mxu0
        %v2137 = vpop.f32.mrb[0].mxu0
        %v2138 = vadd.f32 %v1963, %v2137
        %v2139 = vpop.f32.mrb[0].mxu0
        %2140 = vmatprep.mubr.bf16.mxu0 0
        %2141 = vmatmul.mubr.bf16.gmra.mrb[0].mxu0 %v1938
        %v2142 = vpop.f32.mrb[0].mxu0
        %v2143 = vadd.f32 %v1963, %v2142
        %v2144 = vpop.f32.mrb[0].mxu0
        %v2145 = vpop.f32.mrb[0].mxu0
        %v2146 = vadd.f32 %v1963, %v2145
        %v2147 = vpop.f32.mrb[0].mxu0
        %2148 = vmatprep.mubr.bf16.mxu0 0
        %2149 = vmatmul.mubr.bf16.gmra.mrb[0].mxu0 %v1939
        %v2150 = vpop.f32.mrb[0].mxu0
        %v2151 = vadd.f32 %v1963, %v2150
        %v2152 = vpop.f32.mrb[0].mxu0
        %v2153 = vpop.f32.mrb[0].mxu0
        %v2154 = vadd.f32 %v1963, %v2153
        %v2155 = vpop.f32.mrb[0].mxu0
        %2156 = vmatprep.mubr.bf16.mxu0 0
        %2157 = vmatmul.mubr.bf16.gmra.mrb[0].mxu0 %v1940
        %v2158 = vpop.f32.mrb[0].mxu0
        %v2159 = vadd.f32 %v1963, %v2158
        %v2160 = vpop.f32.mrb[0].mxu0
        %v2161 = vpop.f32.mrb[0].mxu0
        %v2162 = vadd.f32 %v1963, %v2161
        %v2163 = vpop.f32.mrb[0].mxu0
        %2164 = vmatprep.mubr.bf16.mxu0 0
        %2165 = vmatmul.mubr.bf16.gmra.mrb[0].mxu0 %v1941
        %v2166 = vpop.f32.mrb[0].mxu0
        %v2167 = vadd.f32 %v1963, %v2166
        %v2168 = vpop.f32.mrb[0].mxu0
        %v2169 = vpop.f32.mrb[0].mxu0
        %v2170 = vadd.f32 %v1963, %v2169
        %v2171 = vpop.f32.mrb[0].mxu0
        %2172 = vdwg.mxu0
        %v2173 = vtanh.pop %v2047
        %v2174 = vtanh.pop %v2050
        %v2175 = vtanh.pop %v2055
        %v2176 = vtanh.pop %v2058
        %v2177 = vtanh.pop %v2063
        %v2178 = vtanh.pop %v2066
        %v2179 = vtanh.pop %v2071
        %v2180 = vtanh.pop %v2074
        %v2181 = vtanh.pop %v2079
        %v2182 = vtanh.pop %v2082
        %v2183 = vtanh.pop %v2087
        %v2184 = vtanh.pop %v2090
        %v2185 = vtanh.pop %v2095
        %v2186 = vtanh.pop %v2098
        %v2187 = vtanh.pop %v2103
        %v2188 = vtanh.pop %v2106
        %v2189 = vtanh.pop %v2111
        %v2190 = vtanh.pop %v2114
        %v2191 = vtanh.pop %v2119
        %v2192 = vtanh.pop %v2122
        %v2193 = vtanh.pop %v2127
        %v2194 = vtanh.pop %v2130
        %v2195 = vtanh.pop %v2135
        %v2196 = vtanh.pop %v2138
        %v2197 = vtanh.pop %v2143
        %v2198 = vtanh.pop %v2146
        %v2199 = vtanh.pop %v2151
        %v2200 = vtanh.pop %v2154
        %v2201 = vtanh.pop %v2159
        %v2202 = vtanh.pop %v2162
        %v2203 = vtanh.pop %v2167
        %v2204 = vtanh.pop %v2170
        %v2205 = vpack.c.bf16 %v2174, %v2173
        %v2206 = vpack.c.bf16 %v2176, %v2175
        %v2207 = vpack.c.bf16 %v2178, %v2177
        %v2208 = vpack.c.bf16 %v2180, %v2179
        %v2209 = vpack.c.bf16 %v2182, %v2181
        %v2210 = vpack.c.bf16 %v2184, %v2183
        %v2211 = vpack.c.bf16 %v2186, %v2185
        %v2212 = vpack.c.bf16 %v2188, %v2187
        %v2213 = vpack.c.bf16 %v2190, %v2189
        %v2214 = vpack.c.bf16 %v2192, %v2191
        %v2215 = vpack.c.bf16 %v2194, %v2193
        %v2216 = vpack.c.bf16 %v2196, %v2195
        %v2217 = vpack.c.bf16 %v2198, %v2197
        %v2218 = vpack.c.bf16 %v2200, %v2199
        %v2219 = vpack.c.bf16 %v2202, %v2201
        %v2220 = vpack.c.bf16 %v2204, %v2203
        %s2221 = scalar_lea.vmem %s1, 448
        %v2222 = vld [vmem:[%s2221] sm:$0xf]
        %v2223 = vld [vmem:[%s2221 + $0x4] sm:$0xf]
        %v2224 = vld [vmem:[%s2221 + $0x8] sm:$0xf]
        %v2225 = vld [vmem:[%s2221 + $0xc] sm:$0xf]
        %v2226 = vld [vmem:[%s2221 + $0x10] sm:$0xf]
        %v2227 = vld [vmem:[%s2221 + $0x14] sm:$0xf]
        %v2228 = vld [vmem:[%s2221 + $0x18] sm:$0xf]
        %v2229 = vld [vmem:[%s2221 + $0x1c] sm:$0xf]
        %v2230 = vld [vmem:[%s2221 + $0x20] sm:$0xf]
        %v2231 = vld [vmem:[%s2221 + $0x24] sm:$0xf]
        %v2232 = vld [vmem:[%s2221 + $0x28] sm:$0xf]
        %v2233 = vld [vmem:[%s2221 + $0x2c] sm:$0xf]
        %v2234 = vld [vmem:[%s2221 + $0x30] sm:$0xf]
        %v2235 = vld [vmem:[%s2221 + $0x34] sm:$0xf]
        %v2236 = vld [vmem:[%s2221 + $0x38] sm:$0xf]
        %v2237 = vld [vmem:[%s2221 + $0x3c] sm:$0xf]
        %v2238 = vld [vmem:[%s2 + $0x7] sm:$0x1]
        %v2239 = vlaneseq
        %v2240 = vshrl.u32 %v2239, 7
        %v2241 = vsub.s32 0, %v2240
        %v2242 = vrot.slane %v2238, %v2241
        %v2259 = vunpack.c.l.b16 %v2222
        %v2260 = vunpack.c.l.b16 %v2223
        %v2261 = vunpack.c.l.b16 %v2224
        %v2262 = vunpack.c.l.b16 %v2225
        %v2263 = vunpack.c.l.b16 %v2226
        %v2264 = vunpack.c.l.b16 %v2227
        %v2265 = vunpack.c.l.b16 %v2228
        %v2266 = vunpack.c.l.b16 %v2229
        %v2267 = vunpack.c.l.b16 %v2230
        %v2268 = vunpack.c.l.b16 %v2231
        %v2269 = vunpack.c.l.b16 %v2232
        %v2270 = vunpack.c.l.b16 %v2233
        %v2271 = vunpack.c.l.b16 %v2234
        %v2272 = vunpack.c.l.b16 %v2235
        %v2273 = vunpack.c.l.b16 %v2236
        %v2274 = vunpack.c.l.b16 %v2237
        %v2275 = vpack.c.b16 %v2260, %v2259
        %v2276 = vpack.c.b16 %v2262, %v2261
        %v2277 = vpack.c.b16 %v2264, %v2263
        %v2278 = vpack.c.b16 %v2266, %v2265
        %v2279 = vpack.c.b16 %v2268, %v2267
        %v2280 = vpack.c.b16 %v2270, %v2269
        %v2281 = vpack.c.b16 %v2272, %v2271
        %v2282 = vpack.c.b16 %v2274, %v2273
        %2291 = vmatprep.subr.bf16.mxu0 0
        %2292 = vmatpush1.bf16.msra.mxu0 %v2275
        %2293 = vmatprep.subr.bf16.mxu0 0
        %2294 = vmatpush1.bf16.msra.mxu0 %v2276
        %2295 = vmatprep.subr.bf16.mxu0 0
        %2296 = vmatpush1.bf16.msra.mxu0 %v2277
        %2297 = vmatprep.subr.bf16.mxu0 0
        %2298 = vmatpush1.bf16.msra.mxu0 %v2278
        %2299 = vmatprep.subr.bf16.mxu0 0
        %2300 = vmatpush1.bf16.msra.mxu0 %v2279
        %2301 = vmatprep.subr.bf16.mxu0 0
        %2302 = vmatpush1.bf16.msra.mxu0 %v2280
        %2303 = vmatprep.subr.bf16.mxu0 0
        %2304 = vmatpush1.bf16.msra.mxu0 %v2281
        %2305 = vmatprep.subr.bf16.mxu0 0
        %2306 = vmatpush1.bf16.msra.mxu0 %v2282
        %2307 = vmatprep.subr.bf16.mxu0 0
        %2308 = vmatpush1.bf16.msra.mxu0 0
        %2309 = vmatprep.subr.bf16.mxu0 0
        %2310 = vmatpush1.bf16.msra.mxu0 0
        %2311 = vmatprep.subr.bf16.mxu0 0
        %2312 = vmatpush1.bf16.msra.mxu0 0
        %2313 = vmatprep.subr.bf16.mxu0 0
        %2314 = vmatpush1.bf16.msra.mxu0 0
        %2315 = vmatprep.subr.bf16.mxu0 0
        %2316 = vmatpush1.bf16.msra.mxu0 0
        %2317 = vmatprep.subr.bf16.mxu0 0
        %2318 = vmatpush1.bf16.msra.mxu0 0
        %2319 = vmatprep.subr.bf16.mxu0 0
        %2320 = vmatpush1.bf16.msra.mxu0 0
        %2321 = vmatprep.subr.bf16.mxu0 0
        %2322 = vmatpush1.bf16.msra.mxu0 0
        %2323 = vmatprep.mubr.bf16.mxu0 0
        %2324 = vmatmul.mubr.bf16.gmra.mrb[0].mxu0 %v2205
        %v2325 = vpop.f32.mrb[0].mxu0
        %v2326 = vadd.f32 %v2242, %v2325
        %v2327 = vpop.f32.mrb[0].mxu0
        %v2328 = vpop.f32.mrb[0].mxu0
        %v2329 = vadd.f32 %v2242, %v2328
        %v2330 = vpop.f32.mrb[0].mxu0
        %2331 = vmatprep.mubr.bf16.mxu0 0
        %2332 = vmatmul.mubr.bf16.gmra.mrb[0].mxu0 %v2206
        %v2333 = vpop.f32.mrb[0].mxu0
        %v2334 = vadd.f32 %v2242, %v2333
        %v2335 = vpop.f32.mrb[0].mxu0
        %v2336 = vpop.f32.mrb[0].mxu0
        %v2337 = vadd.f32 %v2242, %v2336
        %v2338 = vpop.f32.mrb[0].mxu0
        %2339 = vmatprep.mubr.bf16.mxu0 0
        %2340 = vmatmul.mubr.bf16.gmra.mrb[0].mxu0 %v2207
        %v2341 = vpop.f32.mrb[0].mxu0
        %v2342 = vadd.f32 %v2242, %v2341
        %v2343 = vpop.f32.mrb[0].mxu0
        %v2344 = vpop.f32.mrb[0].mxu0
        %v2345 = vadd.f32 %v2242, %v2344
        %v2346 = vpop.f32.mrb[0].mxu0
        %2347 = vmatprep.mubr.bf16.mxu0 0
        %2348 = vmatmul.mubr.bf16.gmra.mrb[0].mxu0 %v2208
        %v2349 = vpop.f32.mrb[0].mxu0
        %v2350 = vadd.f32 %v2242, %v2349
        %v2351 = vpop.f32.mrb[0].mxu0
        %v2352 = vpop.f32.mrb[0].mxu0
        %v2353 = vadd.f32 %v2242, %v2352
        %v2354 = vpop.f32.mrb[0].mxu0
        %2355 = vmatprep.mubr.bf16.mxu0 0
        %2356 = vmatmul.mubr.bf16.gmra.mrb[0].mxu0 %v2209
        %v2357 = vpop.f32.mrb[0].mxu0
        %v2358 = vadd.f32 %v2242, %v2357
        %v2359 = vpop.f32.mrb[0].mxu0
        %v2360 = vpop.f32.mrb[0].mxu0
        %v2361 = vadd.f32 %v2242, %v2360
        %v2362 = vpop.f32.mrb[0].mxu0
        %2363 = vmatprep.mubr.bf16.mxu0 0
        %2364 = vmatmul.mubr.bf16.gmra.mrb[0].mxu0 %v2210
        %v2365 = vpop.f32.mrb[0].mxu0
        %v2366 = vadd.f32 %v2242, %v2365
        %v2367 = vpop.f32.mrb[0].mxu0
        %v2368 = vpop.f32.mrb[0].mxu0
        %v2369 = vadd.f32 %v2242, %v2368
        %v2370 = vpop.f32.mrb[0].mxu0
        %2371 = vmatprep.mubr.bf16.mxu0 0
        %2372 = vmatmul.mubr.bf16.gmra.mrb[0].mxu0 %v2211
        %v2373 = vpop.f32.mrb[0].mxu0
        %v2374 = vadd.f32 %v2242, %v2373
        %v2375 = vpop.f32.mrb[0].mxu0
        %v2376 = vpop.f32.mrb[0].mxu0
        %v2377 = vadd.f32 %v2242, %v2376
        %v2378 = vpop.f32.mrb[0].mxu0
        %2379 = vmatprep.mubr.bf16.mxu0 0
        %2380 = vmatmul.mubr.bf16.gmra.mrb[0].mxu0 %v2212
        %v2381 = vpop.f32.mrb[0].mxu0
        %v2382 = vadd.f32 %v2242, %v2381
        %v2383 = vpop.f32.mrb[0].mxu0
        %v2384 = vpop.f32.mrb[0].mxu0
        %v2385 = vadd.f32 %v2242, %v2384
        %v2386 = vpop.f32.mrb[0].mxu0
        %2387 = vmatprep.mubr.bf16.mxu0 0
        %2388 = vmatmul.mubr.bf16.gmra.mrb[0].mxu0 %v2213
        %v2389 = vpop.f32.mrb[0].mxu0
        %v2390 = vadd.f32 %v2242, %v2389
        %v2391 = vpop.f32.mrb[0].mxu0
        %v2392 = vpop.f32.mrb[0].mxu0
        %v2393 = vadd.f32 %v2242, %v2392
        %v2394 = vpop.f32.mrb[0].mxu0
        %2395 = vmatprep.mubr.bf16.mxu0 0
        %2396 = vmatmul.mubr.bf16.gmra.mrb[0].mxu0 %v2214
        %v2397 = vpop.f32.mrb[0].mxu0
        %v2398 = vadd.f32 %v2242, %v2397
        %v2399 = vpop.f32.mrb[0].mxu0
        %v2400 = vpop.f32.mrb[0].mxu0
        %v2401 = vadd.f32 %v2242, %v2400
        %v2402 = vpop.f32.mrb[0].mxu0
        %2403 = vmatprep.mubr.bf16.mxu0 0
        %2404 = vmatmul.mubr.bf16.gmra.mrb[0].mxu0 %v2215
        %v2405 = vpop.f32.mrb[0].mxu0
        %v2406 = vadd.f32 %v2242, %v2405
        %v2407 = vpop.f32.mrb[0].mxu0
        %v2408 = vpop.f32.mrb[0].mxu0
        %v2409 = vadd.f32 %v2242, %v2408
        %v2410 = vpop.f32.mrb[0].mxu0
        %2411 = vmatprep.mubr.bf16.mxu0 0
        %2412 = vmatmul.mubr.bf16.gmra.mrb[0].mxu0 %v2216
        %v2413 = vpop.f32.mrb[0].mxu0
        %v2414 = vadd.f32 %v2242, %v2413
        %v2415 = vpop.f32.mrb[0].mxu0
        %v2416 = vpop.f32.mrb[0].mxu0
        %v2417 = vadd.f32 %v2242, %v2416
        %v2418 = vpop.f32.mrb[0].mxu0
        %2419 = vmatprep.mubr.bf16.mxu0 0
        %2420 = vmatmul.mubr.bf16.gmra.mrb[0].mxu0 %v2217
        %v2421 = vpop.f32.mrb[0].mxu0
        %v2422 = vadd.f32 %v2242, %v2421
        %v2423 = vpop.f32.mrb[0].mxu0
        %v2424 = vpop.f32.mrb[0].mxu0
        %v2425 = vadd.f32 %v2242, %v2424
        %v2426 = vpop.f32.mrb[0].mxu0
        %2427 = vmatprep.mubr.bf16.mxu0 0
        %2428 = vmatmul.mubr.bf16.gmra.mrb[0].mxu0 %v2218
        %v2429 = vpop.f32.mrb[0].mxu0
        %v2430 = vadd.f32 %v2242, %v2429
        %v2431 = vpop.f32.mrb[0].mxu0
        %v2432 = vpop.f32.mrb[0].mxu0
        %v2433 = vadd.f32 %v2242, %v2432
        %v2434 = vpop.f32.mrb[0].mxu0
        %2435 = vmatprep.mubr.bf16.mxu0 0
        %2436 = vmatmul.mubr.bf16.gmra.mrb[0].mxu0 %v2219
        %v2437 = vpop.f32.mrb[0].mxu0
        %v2438 = vadd.f32 %v2242, %v2437
        %v2439 = vpop.f32.mrb[0].mxu0
        %v2440 = vpop.f32.mrb[0].mxu0
        %v2441 = vadd.f32 %v2242, %v2440
        %v2442 = vpop.f32.mrb[0].mxu0
        %2443 = vmatprep.mubr.bf16.mxu0 0
        %2444 = vmatmul.mubr.bf16.gmra.mrb[0].mxu0 %v2220
        %v2445 = vpop.f32.mrb[0].mxu0
        %v2446 = vadd.f32 %v2242, %v2445
        %v2447 = vpop.f32.mrb[0].mxu0
        %v2448 = vpop.f32.mrb[0].mxu0
        %v2449 = vadd.f32 %v2242, %v2448
        %v2450 = vpop.f32.mrb[0].mxu0
        %2451 = vdwg.mxu0
        %2452 = vst [vmem:[%s164] sm:$0xff] %v2326
        %2453 = vst [vmem:[%s164 + $0x8] sm:$0xff] %v2329
        %2454 = vst [vmem:[%s164 + $0x10] sm:$0xff] %v2334
        %2455 = vst [vmem:[%s164 + $0x18] sm:$0xff] %v2337
        %2456 = vst [vmem:[%s164 + $0x20] sm:$0xff] %v2342
        %2457 = vst [vmem:[%s164 + $0x28] sm:$0xff] %v2345
        %2458 = vst [vmem:[%s164 + $0x30] sm:$0xff] %v2350
        %2459 = vst [vmem:[%s164 + $0x38] sm:$0xff] %v2353
        %2460 = vst [vmem:[%s164 + $0x40] sm:$0xff] %v2358
        %2461 = vst [vmem:[%s164 + $0x48] sm:$0xff] %v2361
        %2462 = vst [vmem:[%s164 + $0x50] sm:$0xff] %v2366
        %2463 = vst [vmem:[%s164 + $0x58] sm:$0xff] %v2369
        %2464 = vst [vmem:[%s164 + $0x60] sm:$0xff] %v2374
        %2465 = vst [vmem:[%s164 + $0x68] sm:$0xff] %v2377
        %2466 = vst [vmem:[%s164 + $0x70] sm:$0xff] %v2382
        %2467 = vst [vmem:[%s164 + $0x78] sm:$0xff] %v2385
        %2468 = vst [vmem:[%s164 + $0x80] sm:$0xff] %v2390
        %2469 = vst [vmem:[%s164 + $0x88] sm:$0xff] %v2393
        %2470 = vst [vmem:[%s164 + $0x90] sm:$0xff] %v2398
        %2471 = vst [vmem:[%s164 + $0x98] sm:$0xff] %v2401
        %2472 = vst [vmem:[%s164 + $0xa0] sm:$0xff] %v2406
        %2473 = vst [vmem:[%s164 + $0xa8] sm:$0xff] %v2409
        %2474 = vst [vmem:[%s164 + $0xb0] sm:$0xff] %v2414
        %2475 = vst [vmem:[%s164 + $0xb8] sm:$0xff] %v2417
        %2476 = vst [vmem:[%s164 + $0xc0] sm:$0xff] %v2422
        %2477 = vst [vmem:[%s164 + $0xc8] sm:$0xff] %v2425
        %2478 = vst [vmem:[%s164 + $0xd0] sm:$0xff] %v2430
        %2479 = vst [vmem:[%s164 + $0xd8] sm:$0xff] %v2433
        %2480 = vst [vmem:[%s164 + $0xe0] sm:$0xff] %v2438
        %2481 = vst [vmem:[%s164 + $0xe8] sm:$0xff] %v2441
        %2482 = vst [vmem:[%s164 + $0xf0] sm:$0xff] %v2446
        %2483 = vst [vmem:[%s164 + $0xf8] sm:$0xff] %v2449
        %s2484 = sand.u32 %s93, 1
        %s2485 = scalar_lea.sflag [#allocation3], %s2484
        %s2486 = sand.u32 %s93, 1
        %s2487 = smul.addr %s2486, 256
        %s2488 = scalar_lea.vmem [#allocation2], %s2487
        // Predicated region
        $region33: #{autoencoder_forward.1} parent=31 // pred_check
          %p2489 = pneg %p103
        $region34: #{autoencoder_forward.1} parent=31 // pred_check_branch
          %2491 = sbr.rel (%p2489) target = $region36
        $region35: #{autoencoder_forward.1} parent=31 // pred_region
          %s2492 = smul.u32 32, %s17
          %s2494 = ssub.s32 4096, 4096
          %2495 = vsyncadd %s2485, %s2494
          %s2496 = smul.addr %s2492, 128
          %s2497 = scalar_lea.hbm %s3, %s2496
          %s2498 = sshll.u32 %s2488, 4
          %s2499 = int_to_ptr.vmem [resolvable:$true] %s2498
          %2504 = dma.vmem_to_hbm [thread:$0]  %s2499, 4096, %s2497, %s2485, 128, 128, 8
        $region36: #{autoencoder_forward.1} parent=31 // pred_fallthru
          _
      $region32: #{autoencoder_forward.1} parent=5 // pred_fallthru
        _
      %p2505 = scmp.le.s32.totalorder 2, %s12
      // Predicated region
      $region37: #{autoencoder_forward.1} parent=5 // pred_check
        %p2506 = pneg %p2505
      $region38: #{autoencoder_forward.1} parent=5 // pred_check_branch
        %2508 = sbr.rel (%p2506) target = $region40
      $region39: #{autoencoder_forward.1} parent=5 // pred_region
        %s2509 = ssub.s32 %s12, 2
        // Predicated region
        $region41: #{autoencoder_forward.1} parent=39 // pred_check
          %p2510 = pneg %p109
        $region42: #{autoencoder_forward.1} parent=39 // pred_check_branch
          %2512 = sbr.rel (%p2510) target = $region44
        $region43: #{autoencoder_forward.1} parent=39 // pred_region
          %s2513 = sand.u32 %s94, 1
          %s2514 = scalar_lea.sflag [#allocation3], %s2513
          %s2515 = sand.u32 %s94, 1
          %s2516 = smul.addr %s2515, 256
          %s2517 = scalar_lea.vmem [#allocation2], %s2516
          %2518 = dma.done %s2514, 4096
        $region44: #{autoencoder_forward.1} parent=39 // pred_fallthru
          _
      $region40: #{autoencoder_forward.1} parent=5 // pred_fallthru
        _
    $region6: #{autoencoder_forward.1} parent=1 // loop_footer
      %s16 = sadd.s32 1, %s12
    $region7: #{autoencoder_forward.1} parent=1 // loop_footer_branch
      %11 = sbr.rel target = $region3
    $region8: #{autoencoder_forward.1} parent=1 // loop_exit
      _
    %2519 = vsyncpa [#allocation3], 1
    %s2520 = scalar_lea.sflag [#allocation3], 1
    %2521 = vsyncpa %s2520, 1

</llo_original>
